<compile_context>
chip_gen: v5e
topology: v5e:2x2
jax: 0.10.0
libtpu: 0.0.40
codegen_flags: <defaults>
</compile_context>

<pallas_src>
import numpy as np
import jax
import jax.numpy as jnp
from jax.experimental import pallas as pl
from jax.experimental.pallas import tpu as pltpu

# ----- static model configuration (toy sizes matching the torch module) -----
VOCAB = 65
CTX = 8
E = 32          # num_embds
H = 4           # num_heads
HS = 8          # head_size
HHS = H * HS    # 32
FF = 4 * E      # 128
NBLOCKS = 2
B, T = 2, 8
N = B * T       # 16 flattened (batch, time) rows for all 2-D matmuls
VP = 128        # vocab padded to a lane-dense multiple of 128

NEG_BIG = -1e30  # finite causal-mask bias (avoids inf - inf corner cases)


def _vmem():
    # Everything is tiny: keep each operand as one full-array block resident in VMEM.
    return pl.BlockSpec(memory_space=pltpu.MemorySpace.VMEM)


def fused_forward_kernel(tok_ref, tok_emb_ref, pos_emb_ref,
                         wqkv_ref, wproj_ref, bproj_ref,
                         w1_ref, b1_ref, w2_ref, b2_ref,
                         lm_w_ref, lm_b_ref, out_ref):
    """Entire BigramLanguageModel forward in one kernel.

    tok_ref:     (N, 1)  int32 token ids (flattened B*T)
    tok_emb_ref: (VP, E) f32   token embedding table, vocab rows zero-padded to VP
    pos_emb_ref: (T, E)  f32
    wqkv_ref:    (L, E, 3*H*hs) bf16  fused [Q | K | V] projection (head-major columns)
    wproj_ref:   (L, H*hs, E)   bf16  bproj_ref: (L, 1, E) f32
    w1_ref:      (L, E, 4E)     bf16  b1_ref:    (L, 1, 4E) f32
    w2_ref:      (L, 4E, E)     bf16  b2_ref:    (L, 1, E) f32
    lm_w_ref:    (E, VP)        bf16  lm_b_ref:  (1, VP) f32
    out_ref:     (N, VP) f32 logits (padded vocab)
    """
    f32 = jnp.float32
    bf16 = jnp.bfloat16

    # ---- token + position embedding; gather done as a one-hot matmul on the MXU ----
    tok = tok_ref[...]                                                    # (N, 1) i32
    onehot = (jax.lax.broadcasted_iota(jnp.int32, (N, VP), 1) == tok).astype(f32)
    x = jnp.dot(onehot, tok_emb_ref[...], preferred_element_type=f32)     # (N, E)
    x = x + jnp.tile(pos_emb_ref[...], (B, 1))                            # (N, E)

    # ---- causal mask bias: built once, shared by every block / head ----
    row = jax.lax.broadcasted_iota(jnp.int32, (T, T), 0)
    col = jax.lax.broadcasted_iota(jnp.int32, (T, T), 1)
    mask_bias = jnp.where(row >= col, 0.0, NEG_BIG).astype(f32)[None]     # (1, T, T)

    scale = f32(E ** (-0.5))  # torch code scales by num_embds**-0.5 (intentional quirk)

    # ---- transformer blocks (statically unrolled; weights stacked on axis 0) ----
    for l in range(NBLOCKS):
        # fused QKV projection: one (N, E) x (E, 3*H*hs) bf16 MXU matmul
        qkv = jnp.dot(x.astype(bf16), wqkv_ref[l],
                      preferred_element_type=f32)                         # (N, 3*HHS)

        heads = []
        for h in range(H):   # tiny (T=8, hs=8) attention core; kept in f32
            q = qkv[:, h * HS:(h + 1) * HS].reshape(B, T, HS)
            k = qkv[:, HHS + h * HS:HHS + (h + 1) * HS].reshape(B, T, HS)
            v = qkv[:, 2 * HHS + h * HS:2 * HHS + (h + 1) * HS].reshape(B, T, HS)
            wei = jnp.einsum('bts,bus->btu', q, k,
                             preferred_element_type=f32) * scale + mask_bias
            wei = wei - jnp.max(wei, axis=-1, keepdims=True)
            p = jnp.exp(wei)
            p = p * pl.reciprocal(jnp.sum(p, axis=-1, keepdims=True), approx=True)
            att = jnp.einsum('btu,bus->bts', p, v, preferred_element_type=f32)
            heads.append(att.reshape(N, HS))

        # concat heads -> single output-projection matmul, then FeedForward
        att_cat = jnp.concatenate(heads, axis=-1).astype(bf16)            # (N, HHS)
        sa = jnp.dot(att_cat, wproj_ref[l],
                     preferred_element_type=f32) + bproj_ref[l]           # (N, E)
        hdn = jnp.maximum(
            jnp.dot(sa.astype(bf16), w1_ref[l],
                    preferred_element_type=f32) + b1_ref[l], 0.0)         # (N, 4E)
        x = jnp.maximum(
            jnp.dot(hdn.astype(bf16), w2_ref[l],
                    preferred_element_type=f32) + b2_ref[l], 0.0)         # (N, E)

    # ---- lm_head: lane-dense (N, E) x (E, VP=128) matmul and unmasked store ----
    out_ref[...] = jnp.dot(x.astype(bf16), lm_w_ref[...],
                           preferred_element_type=f32) + lm_b_ref[...]


def pack_params(params):
    """Repack reference-layout params into the fused-kernel layout."""
    bf16 = jnp.bfloat16
    wqkv, wproj, bproj, w1, b1, w2, b2 = [], [], [], [], [], [], []

    def head_major(w):
        # (H, E, hs) -> (E, H*hs), head-major along the output dim
        return jnp.transpose(w, (1, 0, 2)).reshape(E, HHS)

    for bp in params['blocks']:
        wqkv.append(jnp.concatenate(
            [head_major(bp['wq']), head_major(bp['wk']), head_major(bp['wv'])],
            axis=-1))                                   # (E, 3*H*hs)
        wproj.append(bp['wproj'].reshape(HHS, E))       # concat-then-proj as one matmul
        bproj.append(bp['bproj'])
        w1.append(bp['w1']); b1.append(bp['b1'])
        w2.append(bp['w2']); b2.append(bp['b2'])

    tok_emb_p = jnp.zeros((VP, E), jnp.float32).at[:VOCAB].set(params['tok_emb'])
    lm_w_p = jnp.zeros((E, VP), jnp.float32).at[:, :VOCAB].set(params['lm_w'])
    lm_b_p = jnp.zeros((1, VP), jnp.float32).at[:, :VOCAB].set(params['lm_b'])

    return {
        'tok_emb': tok_emb_p,
        'pos_emb': params['pos_emb'][:T],
        'wqkv': jnp.stack(wqkv).astype(bf16),
        'wproj': jnp.stack(wproj).astype(bf16),
        'bproj': jnp.stack(bproj),
        'w1': jnp.stack(w1).astype(bf16),
        'b1': jnp.stack(b1),
        'w2': jnp.stack(w2).astype(bf16),
        'b2': jnp.stack(b2),
        'lm_w': lm_w_p.astype(bf16),
        'lm_b': lm_b_p,
    }


def bigram_forward(tokens, packed):
    """One fused pallas_call: embeddings -> NBLOCKS transformer blocks -> lm_head."""
    args = (tokens.reshape(N, 1).astype(jnp.int32),
            packed['tok_emb'], packed['pos_emb'],
            packed['wqkv'], packed['wproj'], packed['bproj'],
            packed['w1'], packed['b1'], packed['w2'], packed['b2'],
            packed['lm_w'], packed['lm_b'])
    out = pl.pallas_call(
        fused_forward_kernel,
        out_shape=jax.ShapeDtypeStruct((N, VP), jnp.float32),
        in_specs=[_vmem() for _ in args],
        out_specs=_vmem(),
    )(*args)
    # TODO(synk): at realistic (large) shapes add a grid over B/T tiles with
    # dimension_semantics=('parallel', ...) and re-derive tile sizes for v7x's 64 MiB VMEM.
    return out.reshape(B, T, VP)[:, :, :VOCAB]


# ---------------- pure-JAX f32 reference for correctness checking ----------------
def reference_forward(tokens, params):
    _, Tt = tokens.shape
    x = params['tok_emb'][tokens] + params['pos_emb'][:Tt][None]
    mask = jnp.tril(jnp.ones((Tt, Tt), bool))
    for bp in params['blocks']:
        Ee = x.shape[-1]
        Hh = bp['wq'].shape[0]
        heads = []
        for h in range(Hh):
            q = x @ bp['wq'][h]
            k = x @ bp['wk'][h]
            v = x @ bp['wv'][h]
            wei = jnp.einsum('bts,bus->btu', q, k) * Ee ** (-0.5)
            wei = jnp.where(mask, wei, -jnp.inf)
            wei = jax.nn.softmax(wei, axis=-1)
            heads.append(jnp.einsum('btu,bus->bts', wei, v))
        cat = jnp.concatenate(heads, axis=-1)
        sa = cat @ bp['wproj'].reshape(-1, Ee) + bp['bproj'][0]
        hdn = jnp.maximum(sa @ bp['w1'] + bp['b1'][0], 0.0)
        x = jnp.maximum(hdn @ bp['w2'] + bp['b2'][0], 0.0)
    return x @ params['lm_w'] + params['lm_b'][0]


# ---------------- deterministic parameter init ----------------
def init_params(key, vocab, ctx, e, h, hs, nblocks):
    ks = jax.random.split(key, 4 + nblocks)

    def n(k, shape, scale=0.02):
        return (scale * jax.random.normal(k, shape)).astype(jnp.float32)

    params = {
        'tok_emb': n(ks[0], (vocab, e), 1.0),
        'pos_emb': n(ks[1], (ctx, e), 1.0),
        'lm_w': n(ks[2], (e, vocab), 0.1),
        'lm_b': n(ks[3], (1, vocab), 0.1),
        'blocks': [],
    }
    for i in range(nblocks):
        bk = jax.random.split(ks[4 + i], 9)
        params['blocks'].append({
            'wq': n(bk[0], (h, e, hs), 0.1),
            'wk': n(bk[1], (h, e, hs), 0.1),
            'wv': n(bk[2], (h, e, hs), 0.1),
            'wproj': n(bk[3], (h, hs, e), 0.1),
            'bproj': n(bk[4], (1, e), 0.1),
            'w1': n(bk[5], (e, 4 * e), 0.1),
            'b1': n(bk[6], (1, 4 * e), 0.1),
            'w2': n(bk[7], (4 * e, e), 0.1),
            'b2': n(bk[8], (1, e), 0.1),
        })
    return params


if __name__ == "__main__":
    key = jax.random.PRNGKey(0)
    pkey, tkey = jax.random.split(key)
    params = init_params(pkey, VOCAB, CTX, E, H, HS, NBLOCKS)
    tokens = jax.random.randint(tkey, (B, T), 0, VOCAB, dtype=jnp.int32)

    packed = pack_params(params)
    logits = jax.block_until_ready(bigram_forward(tokens, packed))
    ref = jax.block_until_ready(reference_forward(tokens, params))

    assert logits.shape == (B, T, VOCAB), logits.shape
    # Kernel feeds the MXU bf16 operands (f32 accumulation), so compare against the
    # pure-f32 reference with a bf16-appropriate tolerance.
    np.testing.assert_allclose(np.asarray(logits), np.asarray(ref),
                               rtol=2e-2, atol=2e-2)
    print("KERNEL_OK")
</pallas_src>

<mosaic_0001>
module attributes {stable_mosaic.version = 11 : i64} {
  func.func @fused_forward_kernel(%arg0: memref<16x1xi32, #tpu.memory_space<vmem>>, %arg1: memref<128x32xf32, #tpu.memory_space<vmem>>, %arg2: memref<8x32xf32, #tpu.memory_space<vmem>>, %arg3: memref<2x32x96xbf16, #tpu.memory_space<vmem>>, %arg4: memref<2x32x32xbf16, #tpu.memory_space<vmem>>, %arg5: memref<2x1x32xf32, #tpu.memory_space<vmem>>, %arg6: memref<2x32x128xbf16, #tpu.memory_space<vmem>>, %arg7: memref<2x1x128xf32, #tpu.memory_space<vmem>>, %arg8: memref<2x128x32xbf16, #tpu.memory_space<vmem>>, %arg9: memref<2x1x32xf32, #tpu.memory_space<vmem>>, %arg10: memref<32x128xbf16, #tpu.memory_space<vmem>>, %arg11: memref<1x128xf32, #tpu.memory_space<vmem>>, %arg12: memref<16x128xf32, #tpu.memory_space<vmem>>) attributes {dimension_semantics = [], scalar_prefetch = 0 : i64, scratch_operands = 0 : i64, tpu.core_type = #tpu.core_type<tc>} {
    %c0 = arith.constant 0 : index
    %c0_0 = arith.constant 0 : index
    %0 = vector.load %arg0[%c0, %c0_0] : memref<16x1xi32, #tpu.memory_space<vmem>>, vector<16x1xi32>
    %1 = tpu.iota {dimensions = array<i32: 1>} : vector<16x128xi32>
    %2 = vector.broadcast %0 : vector<16x1xi32> to vector<16x128xi32>
    %3 = arith.cmpi eq, %1, %2 : vector<16x128xi32>
    %4 = arith.extui %3 : vector<16x128xi1> to vector<16x128xi32>
    %5 = arith.sitofp %4 : vector<16x128xi32> to vector<16x128xf32>
    %c0_1 = arith.constant 0 : index
    %c0_2 = arith.constant 0 : index
    %6 = vector.load %arg1[%c0_1, %c0_2] : memref<128x32xf32, #tpu.memory_space<vmem>>, vector<128x32xf32>
    %cst = arith.constant dense<0.000000e+00> : vector<16x32xf32>
    %7 = tpu.matmul %5, %6, %cst {dimension_numbers = #tpu.dot_dimension_numbers<[1], [0], [0], [1], [0, 0, 1, 1], [], []>} : vector<16x128xf32>, vector<128x32xf32>, vector<16x32xf32> -> vector<16x32xf32>
    %c0_3 = arith.constant 0 : index
    %c0_4 = arith.constant 0 : index
    %8 = vector.load %arg2[%c0_3, %c0_4] : memref<8x32xf32, #tpu.memory_space<vmem>>, vector<8x32xf32>
    %9 = tpu.concatenate %8, %8 in 0 : vector<8x32xf32>, vector<8x32xf32> -> vector<16x32xf32>
    %10 = arith.addf %7, %9 : vector<16x32xf32>
    %11 = tpu.iota {dimensions = array<i32: 0>} : vector<8x8xi32>
    %12 = tpu.iota {dimensions = array<i32: 1>} : vector<8x8xi32>
    %13 = arith.cmpi sge, %11, %12 : vector<8x8xi32>
    %cst_5 = arith.constant 0.000000e+00 : f32
    %cst_6 = arith.constant -1.000000e+30 : f32
    %14 = vector.broadcast %cst_5 : f32 to vector<8x8xf32>
    %15 = vector.broadcast %cst_6 : f32 to vector<8x8xf32>
    %16 = arith.select %13, %14, %15 : vector<8x8xi1>, vector<8x8xf32>
    %17 = vector.shape_cast %16 : vector<8x8xf32> to vector<1x8x8xf32>
    %18 = arith.truncf %10 : vector<16x32xf32> to vector<16x32xbf16>
    %c0_7 = arith.constant 0 : index
    %c0_8 = arith.constant 0 : index
    %c0_9 = arith.constant 0 : index
    %19 = vector.load %arg3[%c0_7, %c0_8, %c0_9] : memref<2x32x96xbf16, #tpu.memory_space<vmem>>, vector<1x32x96xbf16>
    %20 = vector.shape_cast %19 : vector<1x32x96xbf16> to vector<32x96xbf16>
    %cst_10 = arith.constant dense<0.000000e+00> : vector<16x96xf32>
    %21 = tpu.matmul %18, %20, %cst_10 {dimension_numbers = #tpu.dot_dimension_numbers<[1], [0], [0], [1], [0, 0, 1, 1], [], []>} : vector<16x32xbf16>, vector<32x96xbf16>, vector<16x96xf32> -> vector<16x96xf32>
    %22 = vector.extract_strided_slice %21 {offsets = [0, 0], sizes = [16, 8], strides = [1, 1]} : vector<16x96xf32> to vector<16x8xf32>
    %23 = vector.shape_cast %22 : vector<16x8xf32> to vector<2x8x8xf32>
    %24 = vector.extract_strided_slice %21 {offsets = [0, 32], sizes = [16, 8], strides = [1, 1]} : vector<16x96xf32> to vector<16x8xf32>
    %25 = vector.shape_cast %24 : vector<16x8xf32> to vector<2x8x8xf32>
    %26 = vector.extract_strided_slice %21 {offsets = [0, 64], sizes = [16, 8], strides = [1, 1]} : vector<16x96xf32> to vector<16x8xf32>
    %27 = vector.shape_cast %26 : vector<16x8xf32> to vector<2x8x8xf32>
    "tpu.trace_start"() <{level = 10 : i32, message = "bts,bus->btu"}> : () -> ()
    %cst_11 = arith.constant dense<0.000000e+00> : vector<2x8x8xf32>
    %28 = tpu.matmul %23, %25, %cst_11 {dimension_numbers = #tpu.dot_dimension_numbers<[2], [2], [1], [1], [0, 0, 0, 1, 1, 1], [0], [0]>} : vector<2x8x8xf32>, vector<2x8x8xf32>, vector<2x8x8xf32> -> vector<2x8x8xf32>
    "tpu.trace_stop"() : () -> ()
    %cst_12 = arith.constant 0.176776692 : f32
    %29 = vector.broadcast %cst_12 : f32 to vector<2x8x8xf32>
    %30 = arith.mulf %28, %29 : vector<2x8x8xf32>
    %31 = vector.broadcast %17 : vector<1x8x8xf32> to vector<2x8x8xf32>
    %32 = arith.addf %30, %31 : vector<2x8x8xf32>
    %cst_13 = arith.constant dense<0xFF800000> : vector<2x8xf32>
    %33 = vector.multi_reduction <maximumf>, %32, %cst_13 [2] : vector<2x8x8xf32> to vector<2x8xf32>
    %34 = vector.shape_cast %33 : vector<2x8xf32> to vector<2x8x1xf32>
    %35 = vector.broadcast %34 : vector<2x8x1xf32> to vector<2x8x8xf32>
    %36 = arith.subf %32, %35 : vector<2x8x8xf32>
    %37 = math.exp %36 : vector<2x8x8xf32>
    %cst_14 = arith.constant dense<0.000000e+00> : vector<2x8xf32>
    %38 = vector.multi_reduction <add>, %37, %cst_14 [2] : vector<2x8x8xf32> to vector<2x8xf32>
    %39 = vector.shape_cast %38 : vector<2x8xf32> to vector<2x8x1xf32>
    %40 = tpu.reciprocal %39 {approx = true} : vector<2x8x1xf32> -> vector<2x8x1xf32>
    %41 = vector.broadcast %40 : vector<2x8x1xf32> to vector<2x8x8xf32>
    %42 = arith.mulf %37, %41 : vector<2x8x8xf32>
    "tpu.trace_start"() <{level = 10 : i32, message = "btu,bus->bts"}> : () -> ()
    %cst_15 = arith.constant dense<0.000000e+00> : vector<2x8x8xf32>
    %43 = tpu.matmul %42, %27, %cst_15 {dimension_numbers = #tpu.dot_dimension_numbers<[2], [1], [1], [2], [0, 0, 0, 1, 1, 2], [0], [0]>} : vector<2x8x8xf32>, vector<2x8x8xf32>, vector<2x8x8xf32> -> vector<2x8x8xf32>
    "tpu.trace_stop"() : () -> ()
    %44 = vector.shape_cast %43 : vector<2x8x8xf32> to vector<16x8xf32>
    %45 = vector.extract_strided_slice %21 {offsets = [0, 8], sizes = [16, 8], strides = [1, 1]} : vector<16x96xf32> to vector<16x8xf32>
    %46 = vector.shape_cast %45 : vector<16x8xf32> to vector<2x8x8xf32>
    %47 = vector.extract_strided_slice %21 {offsets = [0, 40], sizes = [16, 8], strides = [1, 1]} : vector<16x96xf32> to vector<16x8xf32>
    %48 = vector.shape_cast %47 : vector<16x8xf32> to vector<2x8x8xf32>
    %49 = vector.extract_strided_slice %21 {offsets = [0, 72], sizes = [16, 8], strides = [1, 1]} : vector<16x96xf32> to vector<16x8xf32>
    %50 = vector.shape_cast %49 : vector<16x8xf32> to vector<2x8x8xf32>
    "tpu.trace_start"() <{level = 10 : i32, message = "bts,bus->btu"}> : () -> ()
    %cst_16 = arith.constant dense<0.000000e+00> : vector<2x8x8xf32>
    %51 = tpu.matmul %46, %48, %cst_16 {dimension_numbers = #tpu.dot_dimension_numbers<[2], [2], [1], [1], [0, 0, 0, 1, 1, 1], [0], [0]>} : vector<2x8x8xf32>, vector<2x8x8xf32>, vector<2x8x8xf32> -> vector<2x8x8xf32>
    "tpu.trace_stop"() : () -> ()
    %cst_17 = arith.constant 0.176776692 : f32
    %52 = vector.broadcast %cst_17 : f32 to vector<2x8x8xf32>
    %53 = arith.mulf %51, %52 : vector<2x8x8xf32>
    %54 = vector.broadcast %17 : vector<1x8x8xf32> to vector<2x8x8xf32>
    %55 = arith.addf %53, %54 : vector<2x8x8xf32>
    %cst_18 = arith.constant dense<0xFF800000> : vector<2x8xf32>
    %56 = vector.multi_reduction <maximumf>, %55, %cst_18 [2] : vector<2x8x8xf32> to vector<2x8xf32>
    %57 = vector.shape_cast %56 : vector<2x8xf32> to vector<2x8x1xf32>
    %58 = vector.broadcast %57 : vector<2x8x1xf32> to vector<2x8x8xf32>
    %59 = arith.subf %55, %58 : vector<2x8x8xf32>
    %60 = math.exp %59 : vector<2x8x8xf32>
    %cst_19 = arith.constant dense<0.000000e+00> : vector<2x8xf32>
    %61 = vector.multi_reduction <add>, %60, %cst_19 [2] : vector<2x8x8xf32> to vector<2x8xf32>
    %62 = vector.shape_cast %61 : vector<2x8xf32> to vector<2x8x1xf32>
    %63 = tpu.reciprocal %62 {approx = true} : vector<2x8x1xf32> -> vector<2x8x1xf32>
    %64 = vector.broadcast %63 : vector<2x8x1xf32> to vector<2x8x8xf32>
    %65 = arith.mulf %60, %64 : vector<2x8x8xf32>
    "tpu.trace_start"() <{level = 10 : i32, message = "btu,bus->bts"}> : () -> ()
    %cst_20 = arith.constant dense<0.000000e+00> : vector<2x8x8xf32>
    %66 = tpu.matmul %65, %50, %cst_20 {dimension_numbers = #tpu.dot_dimension_numbers<[2], [1], [1], [2], [0, 0, 0, 1, 1, 2], [0], [0]>} : vector<2x8x8xf32>, vector<2x8x8xf32>, vector<2x8x8xf32> -> vector<2x8x8xf32>
    "tpu.trace_stop"() : () -> ()
    %67 = vector.shape_cast %66 : vector<2x8x8xf32> to vector<16x8xf32>
    %68 = vector.extract_strided_slice %21 {offsets = [0, 16], sizes = [16, 8], strides = [1, 1]} : vector<16x96xf32> to vector<16x8xf32>
    %69 = vector.shape_cast %68 : vector<16x8xf32> to vector<2x8x8xf32>
    %70 = vector.extract_strided_slice %21 {offsets = [0, 48], sizes = [16, 8], strides = [1, 1]} : vector<16x96xf32> to vector<16x8xf32>
    %71 = vector.shape_cast %70 : vector<16x8xf32> to vector<2x8x8xf32>
    %72 = vector.extract_strided_slice %21 {offsets = [0, 80], sizes = [16, 8], strides = [1, 1]} : vector<16x96xf32> to vector<16x8xf32>
    %73 = vector.shape_cast %72 : vector<16x8xf32> to vector<2x8x8xf32>
    "tpu.trace_start"() <{level = 10 : i32, message = "bts,bus->btu"}> : () -> ()
    %cst_21 = arith.constant dense<0.000000e+00> : vector<2x8x8xf32>
    %74 = tpu.matmul %69, %71, %cst_21 {dimension_numbers = #tpu.dot_dimension_numbers<[2], [2], [1], [1], [0, 0, 0, 1, 1, 1], [0], [0]>} : vector<2x8x8xf32>, vector<2x8x8xf32>, vector<2x8x8xf32> -> vector<2x8x8xf32>
    "tpu.trace_stop"() : () -> ()
    %cst_22 = arith.constant 0.176776692 : f32
    %75 = vector.broadcast %cst_22 : f32 to vector<2x8x8xf32>
    %76 = arith.mulf %74, %75 : vector<2x8x8xf32>
    %77 = vector.broadcast %17 : vector<1x8x8xf32> to vector<2x8x8xf32>
    %78 = arith.addf %76, %77 : vector<2x8x8xf32>
    %cst_23 = arith.constant dense<0xFF800000> : vector<2x8xf32>
    %79 = vector.multi_reduction <maximumf>, %78, %cst_23 [2] : vector<2x8x8xf32> to vector<2x8xf32>
    %80 = vector.shape_cast %79 : vector<2x8xf32> to vector<2x8x1xf32>
    %81 = vector.broadcast %80 : vector<2x8x1xf32> to vector<2x8x8xf32>
    %82 = arith.subf %78, %81 : vector<2x8x8xf32>
    %83 = math.exp %82 : vector<2x8x8xf32>
    %cst_24 = arith.constant dense<0.000000e+00> : vector<2x8xf32>
    %84 = vector.multi_reduction <add>, %83, %cst_24 [2] : vector<2x8x8xf32> to vector<2x8xf32>
    %85 = vector.shape_cast %84 : vector<2x8xf32> to vector<2x8x1xf32>
    %86 = tpu.reciprocal %85 {approx = true} : vector<2x8x1xf32> -> vector<2x8x1xf32>
    %87 = vector.broadcast %86 : vector<2x8x1xf32> to vector<2x8x8xf32>
    %88 = arith.mulf %83, %87 : vector<2x8x8xf32>
    "tpu.trace_start"() <{level = 10 : i32, message = "btu,bus->bts"}> : () -> ()
    %cst_25 = arith.constant dense<0.000000e+00> : vector<2x8x8xf32>
    %89 = tpu.matmul %88, %73, %cst_25 {dimension_numbers = #tpu.dot_dimension_numbers<[2], [1], [1], [2], [0, 0, 0, 1, 1, 2], [0], [0]>} : vector<2x8x8xf32>, vector<2x8x8xf32>, vector<2x8x8xf32> -> vector<2x8x8xf32>
    "tpu.trace_stop"() : () -> ()
    %90 = vector.shape_cast %89 : vector<2x8x8xf32> to vector<16x8xf32>
    %91 = vector.extract_strided_slice %21 {offsets = [0, 24], sizes = [16, 8], strides = [1, 1]} : vector<16x96xf32> to vector<16x8xf32>
    %92 = vector.shape_cast %91 : vector<16x8xf32> to vector<2x8x8xf32>
    %93 = vector.extract_strided_slice %21 {offsets = [0, 56], sizes = [16, 8], strides = [1, 1]} : vector<16x96xf32> to vector<16x8xf32>
    %94 = vector.shape_cast %93 : vector<16x8xf32> to vector<2x8x8xf32>
    %95 = vector.extract_strided_slice %21 {offsets = [0, 88], sizes = [16, 8], strides = [1, 1]} : vector<16x96xf32> to vector<16x8xf32>
    %96 = vector.shape_cast %95 : vector<16x8xf32> to vector<2x8x8xf32>
    "tpu.trace_start"() <{level = 10 : i32, message = "bts,bus->btu"}> : () -> ()
    %cst_26 = arith.constant dense<0.000000e+00> : vector<2x8x8xf32>
    %97 = tpu.matmul %92, %94, %cst_26 {dimension_numbers = #tpu.dot_dimension_numbers<[2], [2], [1], [1], [0, 0, 0, 1, 1, 1], [0], [0]>} : vector<2x8x8xf32>, vector<2x8x8xf32>, vector<2x8x8xf32> -> vector<2x8x8xf32>
    "tpu.trace_stop"() : () -> ()
    %cst_27 = arith.constant 0.176776692 : f32
    %98 = vector.broadcast %cst_27 : f32 to vector<2x8x8xf32>
    %99 = arith.mulf %97, %98 : vector<2x8x8xf32>
    %100 = vector.broadcast %17 : vector<1x8x8xf32> to vector<2x8x8xf32>
    %101 = arith.addf %99, %100 : vector<2x8x8xf32>
    %cst_28 = arith.constant dense<0xFF800000> : vector<2x8xf32>
    %102 = vector.multi_reduction <maximumf>, %101, %cst_28 [2] : vector<2x8x8xf32> to vector<2x8xf32>
    %103 = vector.shape_cast %102 : vector<2x8xf32> to vector<2x8x1xf32>
    %104 = vector.broadcast %103 : vector<2x8x1xf32> to vector<2x8x8xf32>
    %105 = arith.subf %101, %104 : vector<2x8x8xf32>
    %106 = math.exp %105 : vector<2x8x8xf32>
    %cst_29 = arith.constant dense<0.000000e+00> : vector<2x8xf32>
    %107 = vector.multi_reduction <add>, %106, %cst_29 [2] : vector<2x8x8xf32> to vector<2x8xf32>
    %108 = vector.shape_cast %107 : vector<2x8xf32> to vector<2x8x1xf32>
    %109 = tpu.reciprocal %108 {approx = true} : vector<2x8x1xf32> -> vector<2x8x1xf32>
    %110 = vector.broadcast %109 : vector<2x8x1xf32> to vector<2x8x8xf32>
    %111 = arith.mulf %106, %110 : vector<2x8x8xf32>
    "tpu.trace_start"() <{level = 10 : i32, message = "btu,bus->bts"}> : () -> ()
    %cst_30 = arith.constant dense<0.000000e+00> : vector<2x8x8xf32>
    %112 = tpu.matmul %111, %96, %cst_30 {dimension_numbers = #tpu.dot_dimension_numbers<[2], [1], [1], [2], [0, 0, 0, 1, 1, 2], [0], [0]>} : vector<2x8x8xf32>, vector<2x8x8xf32>, vector<2x8x8xf32> -> vector<2x8x8xf32>
    "tpu.trace_stop"() : () -> ()
    %113 = vector.shape_cast %112 : vector<2x8x8xf32> to vector<16x8xf32>
    %114 = tpu.concatenate %44, %67, %90, %113 in 1 : vector<16x8xf32>, vector<16x8xf32>, vector<16x8xf32>, vector<16x8xf32> -> vector<16x32xf32>
    %115 = arith.truncf %114 : vector<16x32xf32> to vector<16x32xbf16>
    %c0_31 = arith.constant 0 : index
    %c0_32 = arith.constant 0 : index
    %c0_33 = arith.constant 0 : index
    %116 = vector.load %arg4[%c0_31, %c0_32, %c0_33] : memref<2x32x32xbf16, #tpu.memory_space<vmem>>, vector<1x32x32xbf16>
    %117 = vector.shape_cast %116 : vector<1x32x32xbf16> to vector<32x32xbf16>
    %cst_34 = arith.constant dense<0.000000e+00> : vector<16x32xf32>
    %118 = tpu.matmul %115, %117, %cst_34 {dimension_numbers = #tpu.dot_dimension_numbers<[1], [0], [0], [1], [0, 0, 1, 1], [], []>} : vector<16x32xbf16>, vector<32x32xbf16>, vector<16x32xf32> -> vector<16x32xf32>
    %c0_35 = arith.constant 0 : index
    %c0_36 = arith.constant 0 : index
    %c0_37 = arith.constant 0 : index
    %119 = vector.load %arg5[%c0_35, %c0_36, %c0_37] : memref<2x1x32xf32, #tpu.memory_space<vmem>>, vector<1x1x32xf32>
    %120 = vector.shape_cast %119 : vector<1x1x32xf32> to vector<1x32xf32>
    %121 = vector.broadcast %120 : vector<1x32xf32> to vector<16x32xf32>
    %122 = arith.addf %118, %121 : vector<16x32xf32>
    %123 = arith.truncf %122 : vector<16x32xf32> to vector<16x32xbf16>
    %c0_38 = arith.constant 0 : index
    %c0_39 = arith.constant 0 : index
    %c0_40 = arith.constant 0 : index
    %124 = vector.load %arg6[%c0_38, %c0_39, %c0_40] : memref<2x32x128xbf16, #tpu.memory_space<vmem>>, vector<1x32x128xbf16>
    %125 = vector.shape_cast %124 : vector<1x32x128xbf16> to vector<32x128xbf16>
    %cst_41 = arith.constant dense<0.000000e+00> : vector<16x128xf32>
    %126 = tpu.matmul %123, %125, %cst_41 {dimension_numbers = #tpu.dot_dimension_numbers<[1], [0], [0], [1], [0, 0, 1, 1], [], []>} : vector<16x32xbf16>, vector<32x128xbf16>, vector<16x128xf32> -> vector<16x128xf32>
    %c0_42 = arith.constant 0 : index
    %c0_43 = arith.constant 0 : index
    %c0_44 = arith.constant 0 : index
    %127 = vector.load %arg7[%c0_42, %c0_43, %c0_44] : memref<2x1x128xf32, #tpu.memory_space<vmem>>, vector<1x1x128xf32>
    %128 = vector.shape_cast %127 : vector<1x1x128xf32> to vector<1x128xf32>
    %129 = vector.broadcast %128 : vector<1x128xf32> to vector<16x128xf32>
    %130 = arith.addf %126, %129 : vector<16x128xf32>
    %cst_45 = arith.constant 0.000000e+00 : f32
    %131 = vector.broadcast %cst_45 : f32 to vector<16x128xf32>
    %132 = arith.maximumf %130, %131 : vector<16x128xf32>
    %133 = arith.truncf %132 : vector<16x128xf32> to vector<16x128xbf16>
    %c0_46 = arith.constant 0 : index
    %c0_47 = arith.constant 0 : index
    %c0_48 = arith.constant 0 : index
    %134 = vector.load %arg8[%c0_46, %c0_47, %c0_48] : memref<2x128x32xbf16, #tpu.memory_space<vmem>>, vector<1x128x32xbf16>
    %135 = vector.shape_cast %134 : vector<1x128x32xbf16> to vector<128x32xbf16>
    %cst_49 = arith.constant dense<0.000000e+00> : vector<16x32xf32>
    %136 = tpu.matmul %133, %135, %cst_49 {dimension_numbers = #tpu.dot_dimension_numbers<[1], [0], [0], [1], [0, 0, 1, 1], [], []>} : vector<16x128xbf16>, vector<128x32xbf16>, vector<16x32xf32> -> vector<16x32xf32>
    %c0_50 = arith.constant 0 : index
    %c0_51 = arith.constant 0 : index
    %c0_52 = arith.constant 0 : index
    %137 = vector.load %arg9[%c0_50, %c0_51, %c0_52] : memref<2x1x32xf32, #tpu.memory_space<vmem>>, vector<1x1x32xf32>
    %138 = vector.shape_cast %137 : vector<1x1x32xf32> to vector<1x32xf32>
    %139 = vector.broadcast %138 : vector<1x32xf32> to vector<16x32xf32>
    %140 = arith.addf %136, %139 : vector<16x32xf32>
    %cst_53 = arith.constant 0.000000e+00 : f32
    %141 = vector.broadcast %cst_53 : f32 to vector<16x32xf32>
    %142 = arith.maximumf %140, %141 : vector<16x32xf32>
    %143 = arith.truncf %142 : vector<16x32xf32> to vector<16x32xbf16>
    %c1 = arith.constant 1 : index
    %c0_54 = arith.constant 0 : index
    %c0_55 = arith.constant 0 : index
    %144 = vector.load %arg3[%c1, %c0_54, %c0_55] : memref<2x32x96xbf16, #tpu.memory_space<vmem>>, vector<1x32x96xbf16>
    %145 = vector.shape_cast %144 : vector<1x32x96xbf16> to vector<32x96xbf16>
    %cst_56 = arith.constant dense<0.000000e+00> : vector<16x96xf32>
    %146 = tpu.matmul %143, %145, %cst_56 {dimension_numbers = #tpu.dot_dimension_numbers<[1], [0], [0], [1], [0, 0, 1, 1], [], []>} : vector<16x32xbf16>, vector<32x96xbf16>, vector<16x96xf32> -> vector<16x96xf32>
    %147 = vector.extract_strided_slice %146 {offsets = [0, 0], sizes = [16, 8], strides = [1, 1]} : vector<16x96xf32> to vector<16x8xf32>
    %148 = vector.shape_cast %147 : vector<16x8xf32> to vector<2x8x8xf32>
    %149 = vector.extract_strided_slice %146 {offsets = [0, 32], sizes = [16, 8], strides = [1, 1]} : vector<16x96xf32> to vector<16x8xf32>
    %150 = vector.shape_cast %149 : vector<16x8xf32> to vector<2x8x8xf32>
    %151 = vector.extract_strided_slice %146 {offsets = [0, 64], sizes = [16, 8], strides = [1, 1]} : vector<16x96xf32> to vector<16x8xf32>
    %152 = vector.shape_cast %151 : vector<16x8xf32> to vector<2x8x8xf32>
    "tpu.trace_start"() <{level = 10 : i32, message = "bts,bus->btu"}> : () -> ()
    %cst_57 = arith.constant dense<0.000000e+00> : vector<2x8x8xf32>
    %153 = tpu.matmul %148, %150, %cst_57 {dimension_numbers = #tpu.dot_dimension_numbers<[2], [2], [1], [1], [0, 0, 0, 1, 1, 1], [0], [0]>} : vector<2x8x8xf32>, vector<2x8x8xf32>, vector<2x8x8xf32> -> vector<2x8x8xf32>
    "tpu.trace_stop"() : () -> ()
    %cst_58 = arith.constant 0.176776692 : f32
    %154 = vector.broadcast %cst_58 : f32 to vector<2x8x8xf32>
    %155 = arith.mulf %153, %154 : vector<2x8x8xf32>
    %156 = vector.broadcast %17 : vector<1x8x8xf32> to vector<2x8x8xf32>
    %157 = arith.addf %155, %156 : vector<2x8x8xf32>
    %cst_59 = arith.constant dense<0xFF800000> : vector<2x8xf32>
    %158 = vector.multi_reduction <maximumf>, %157, %cst_59 [2] : vector<2x8x8xf32> to vector<2x8xf32>
    %159 = vector.shape_cast %158 : vector<2x8xf32> to vector<2x8x1xf32>
    %160 = vector.broadcast %159 : vector<2x8x1xf32> to vector<2x8x8xf32>
    %161 = arith.subf %157, %160 : vector<2x8x8xf32>
    %162 = math.exp %161 : vector<2x8x8xf32>
    %cst_60 = arith.constant dense<0.000000e+00> : vector<2x8xf32>
    %163 = vector.multi_reduction <add>, %162, %cst_60 [2] : vector<2x8x8xf32> to vector<2x8xf32>
    %164 = vector.shape_cast %163 : vector<2x8xf32> to vector<2x8x1xf32>
    %165 = tpu.reciprocal %164 {approx = true} : vector<2x8x1xf32> -> vector<2x8x1xf32>
    %166 = vector.broadcast %165 : vector<2x8x1xf32> to vector<2x8x8xf32>
    %167 = arith.mulf %162, %166 : vector<2x8x8xf32>
    "tpu.trace_start"() <{level = 10 : i32, message = "btu,bus->bts"}> : () -> ()
    %cst_61 = arith.constant dense<0.000000e+00> : vector<2x8x8xf32>
    %168 = tpu.matmul %167, %152, %cst_61 {dimension_numbers = #tpu.dot_dimension_numbers<[2], [1], [1], [2], [0, 0, 0, 1, 1, 2], [0], [0]>} : vector<2x8x8xf32>, vector<2x8x8xf32>, vector<2x8x8xf32> -> vector<2x8x8xf32>
    "tpu.trace_stop"() : () -> ()
    %169 = vector.shape_cast %168 : vector<2x8x8xf32> to vector<16x8xf32>
    %170 = vector.extract_strided_slice %146 {offsets = [0, 8], sizes = [16, 8], strides = [1, 1]} : vector<16x96xf32> to vector<16x8xf32>
    %171 = vector.shape_cast %170 : vector<16x8xf32> to vector<2x8x8xf32>
    %172 = vector.extract_strided_slice %146 {offsets = [0, 40], sizes = [16, 8], strides = [1, 1]} : vector<16x96xf32> to vector<16x8xf32>
    %173 = vector.shape_cast %172 : vector<16x8xf32> to vector<2x8x8xf32>
    %174 = vector.extract_strided_slice %146 {offsets = [0, 72], sizes = [16, 8], strides = [1, 1]} : vector<16x96xf32> to vector<16x8xf32>
    %175 = vector.shape_cast %174 : vector<16x8xf32> to vector<2x8x8xf32>
    "tpu.trace_start"() <{level = 10 : i32, message = "bts,bus->btu"}> : () -> ()
    %cst_62 = arith.constant dense<0.000000e+00> : vector<2x8x8xf32>
    %176 = tpu.matmul %171, %173, %cst_62 {dimension_numbers = #tpu.dot_dimension_numbers<[2], [2], [1], [1], [0, 0, 0, 1, 1, 1], [0], [0]>} : vector<2x8x8xf32>, vector<2x8x8xf32>, vector<2x8x8xf32> -> vector<2x8x8xf32>
    "tpu.trace_stop"() : () -> ()
    %cst_63 = arith.constant 0.176776692 : f32
    %177 = vector.broadcast %cst_63 : f32 to vector<2x8x8xf32>
    %178 = arith.mulf %176, %177 : vector<2x8x8xf32>
    %179 = vector.broadcast %17 : vector<1x8x8xf32> to vector<2x8x8xf32>
    %180 = arith.addf %178, %179 : vector<2x8x8xf32>
    %cst_64 = arith.constant dense<0xFF800000> : vector<2x8xf32>
    %181 = vector.multi_reduction <maximumf>, %180, %cst_64 [2] : vector<2x8x8xf32> to vector<2x8xf32>
    %182 = vector.shape_cast %181 : vector<2x8xf32> to vector<2x8x1xf32>
    %183 = vector.broadcast %182 : vector<2x8x1xf32> to vector<2x8x8xf32>
    %184 = arith.subf %180, %183 : vector<2x8x8xf32>
    %185 = math.exp %184 : vector<2x8x8xf32>
    %cst_65 = arith.constant dense<0.000000e+00> : vector<2x8xf32>
    %186 = vector.multi_reduction <add>, %185, %cst_65 [2] : vector<2x8x8xf32> to vector<2x8xf32>
    %187 = vector.shape_cast %186 : vector<2x8xf32> to vector<2x8x1xf32>
    %188 = tpu.reciprocal %187 {approx = true} : vector<2x8x1xf32> -> vector<2x8x1xf32>
    %189 = vector.broadcast %188 : vector<2x8x1xf32> to vector<2x8x8xf32>
    %190 = arith.mulf %185, %189 : vector<2x8x8xf32>
    "tpu.trace_start"() <{level = 10 : i32, message = "btu,bus->bts"}> : () -> ()
    %cst_66 = arith.constant dense<0.000000e+00> : vector<2x8x8xf32>
    %191 = tpu.matmul %190, %175, %cst_66 {dimension_numbers = #tpu.dot_dimension_numbers<[2], [1], [1], [2], [0, 0, 0, 1, 1, 2], [0], [0]>} : vector<2x8x8xf32>, vector<2x8x8xf32>, vector<2x8x8xf32> -> vector<2x8x8xf32>
    "tpu.trace_stop"() : () -> ()
    %192 = vector.shape_cast %191 : vector<2x8x8xf32> to vector<16x8xf32>
    %193 = vector.extract_strided_slice %146 {offsets = [0, 16], sizes = [16, 8], strides = [1, 1]} : vector<16x96xf32> to vector<16x8xf32>
    %194 = vector.shape_cast %193 : vector<16x8xf32> to vector<2x8x8xf32>
    %195 = vector.extract_strided_slice %146 {offsets = [0, 48], sizes = [16, 8], strides = [1, 1]} : vector<16x96xf32> to vector<16x8xf32>
    %196 = vector.shape_cast %195 : vector<16x8xf32> to vector<2x8x8xf32>
    %197 = vector.extract_strided_slice %146 {offsets = [0, 80], sizes = [16, 8], strides = [1, 1]} : vector<16x96xf32> to vector<16x8xf32>
    %198 = vector.shape_cast %197 : vector<16x8xf32> to vector<2x8x8xf32>
    "tpu.trace_start"() <{level = 10 : i32, message = "bts,bus->btu"}> : () -> ()
    %cst_67 = arith.constant dense<0.000000e+00> : vector<2x8x8xf32>
    %199 = tpu.matmul %194, %196, %cst_67 {dimension_numbers = #tpu.dot_dimension_numbers<[2], [2], [1], [1], [0, 0, 0, 1, 1, 1], [0], [0]>} : vector<2x8x8xf32>, vector<2x8x8xf32>, vector<2x8x8xf32> -> vector<2x8x8xf32>
    "tpu.trace_stop"() : () -> ()
    %cst_68 = arith.constant 0.176776692 : f32
    %200 = vector.broadcast %cst_68 : f32 to vector<2x8x8xf32>
    %201 = arith.mulf %199, %200 : vector<2x8x8xf32>
    %202 = vector.broadcast %17 : vector<1x8x8xf32> to vector<2x8x8xf32>
    %203 = arith.addf %201, %202 : vector<2x8x8xf32>
    %cst_69 = arith.constant dense<0xFF800000> : vector<2x8xf32>
    %204 = vector.multi_reduction <maximumf>, %203, %cst_69 [2] : vector<2x8x8xf32> to vector<2x8xf32>
    %205 = vector.shape_cast %204 : vector<2x8xf32> to vector<2x8x1xf32>
    %206 = vector.broadcast %205 : vector<2x8x1xf32> to vector<2x8x8xf32>
    %207 = arith.subf %203, %206 : vector<2x8x8xf32>
    %208 = math.exp %207 : vector<2x8x8xf32>
    %cst_70 = arith.constant dense<0.000000e+00> : vector<2x8xf32>
    %209 = vector.multi_reduction <add>, %208, %cst_70 [2] : vector<2x8x8xf32> to vector<2x8xf32>
    %210 = vector.shape_cast %209 : vector<2x8xf32> to vector<2x8x1xf32>
    %211 = tpu.reciprocal %210 {approx = true} : vector<2x8x1xf32> -> vector<2x8x1xf32>
    %212 = vector.broadcast %211 : vector<2x8x1xf32> to vector<2x8x8xf32>
    %213 = arith.mulf %208, %212 : vector<2x8x8xf32>
    "tpu.trace_start"() <{level = 10 : i32, message = "btu,bus->bts"}> : () -> ()
    %cst_71 = arith.constant dense<0.000000e+00> : vector<2x8x8xf32>
    %214 = tpu.matmul %213, %198, %cst_71 {dimension_numbers = #tpu.dot_dimension_numbers<[2], [1], [1], [2], [0, 0, 0, 1, 1, 2], [0], [0]>} : vector<2x8x8xf32>, vector<2x8x8xf32>, vector<2x8x8xf32> -> vector<2x8x8xf32>
    "tpu.trace_stop"() : () -> ()
    %215 = vector.shape_cast %214 : vector<2x8x8xf32> to vector<16x8xf32>
    %216 = vector.extract_strided_slice %146 {offsets = [0, 24], sizes = [16, 8], strides = [1, 1]} : vector<16x96xf32> to vector<16x8xf32>
    %217 = vector.shape_cast %216 : vector<16x8xf32> to vector<2x8x8xf32>
    %218 = vector.extract_strided_slice %146 {offsets = [0, 56], sizes = [16, 8], strides = [1, 1]} : vector<16x96xf32> to vector<16x8xf32>
    %219 = vector.shape_cast %218 : vector<16x8xf32> to vector<2x8x8xf32>
    %220 = vector.extract_strided_slice %146 {offsets = [0, 88], sizes = [16, 8], strides = [1, 1]} : vector<16x96xf32> to vector<16x8xf32>
    %221 = vector.shape_cast %220 : vector<16x8xf32> to vector<2x8x8xf32>
    "tpu.trace_start"() <{level = 10 : i32, message = "bts,bus->btu"}> : () -> ()
    %cst_72 = arith.constant dense<0.000000e+00> : vector<2x8x8xf32>
    %222 = tpu.matmul %217, %219, %cst_72 {dimension_numbers = #tpu.dot_dimension_numbers<[2], [2], [1], [1], [0, 0, 0, 1, 1, 1], [0], [0]>} : vector<2x8x8xf32>, vector<2x8x8xf32>, vector<2x8x8xf32> -> vector<2x8x8xf32>
    "tpu.trace_stop"() : () -> ()
    %cst_73 = arith.constant 0.176776692 : f32
    %223 = vector.broadcast %cst_73 : f32 to vector<2x8x8xf32>
    %224 = arith.mulf %222, %223 : vector<2x8x8xf32>
    %225 = vector.broadcast %17 : vector<1x8x8xf32> to vector<2x8x8xf32>
    %226 = arith.addf %224, %225 : vector<2x8x8xf32>
    %cst_74 = arith.constant dense<0xFF800000> : vector<2x8xf32>
    %227 = vector.multi_reduction <maximumf>, %226, %cst_74 [2] : vector<2x8x8xf32> to vector<2x8xf32>
    %228 = vector.shape_cast %227 : vector<2x8xf32> to vector<2x8x1xf32>
    %229 = vector.broadcast %228 : vector<2x8x1xf32> to vector<2x8x8xf32>
    %230 = arith.subf %226, %229 : vector<2x8x8xf32>
    %231 = math.exp %230 : vector<2x8x8xf32>
    %cst_75 = arith.constant dense<0.000000e+00> : vector<2x8xf32>
    %232 = vector.multi_reduction <add>, %231, %cst_75 [2] : vector<2x8x8xf32> to vector<2x8xf32>
    %233 = vector.shape_cast %232 : vector<2x8xf32> to vector<2x8x1xf32>
    %234 = tpu.reciprocal %233 {approx = true} : vector<2x8x1xf32> -> vector<2x8x1xf32>
    %235 = vector.broadcast %234 : vector<2x8x1xf32> to vector<2x8x8xf32>
    %236 = arith.mulf %231, %235 : vector<2x8x8xf32>
    "tpu.trace_start"() <{level = 10 : i32, message = "btu,bus->bts"}> : () -> ()
    %cst_76 = arith.constant dense<0.000000e+00> : vector<2x8x8xf32>
    %237 = tpu.matmul %236, %221, %cst_76 {dimension_numbers = #tpu.dot_dimension_numbers<[2], [1], [1], [2], [0, 0, 0, 1, 1, 2], [0], [0]>} : vector<2x8x8xf32>, vector<2x8x8xf32>, vector<2x8x8xf32> -> vector<2x8x8xf32>
    "tpu.trace_stop"() : () -> ()
    %238 = vector.shape_cast %237 : vector<2x8x8xf32> to vector<16x8xf32>
    %239 = tpu.concatenate %169, %192, %215, %238 in 1 : vector<16x8xf32>, vector<16x8xf32>, vector<16x8xf32>, vector<16x8xf32> -> vector<16x32xf32>
    %240 = arith.truncf %239 : vector<16x32xf32> to vector<16x32xbf16>
    %c1_77 = arith.constant 1 : index
    %c0_78 = arith.constant 0 : index
    %c0_79 = arith.constant 0 : index
    %241 = vector.load %arg4[%c1_77, %c0_78, %c0_79] : memref<2x32x32xbf16, #tpu.memory_space<vmem>>, vector<1x32x32xbf16>
    %242 = vector.shape_cast %241 : vector<1x32x32xbf16> to vector<32x32xbf16>
    %cst_80 = arith.constant dense<0.000000e+00> : vector<16x32xf32>
    %243 = tpu.matmul %240, %242, %cst_80 {dimension_numbers = #tpu.dot_dimension_numbers<[1], [0], [0], [1], [0, 0, 1, 1], [], []>} : vector<16x32xbf16>, vector<32x32xbf16>, vector<16x32xf32> -> vector<16x32xf32>
    %c1_81 = arith.constant 1 : index
    %c0_82 = arith.constant 0 : index
    %c0_83 = arith.constant 0 : index
    %244 = vector.load %arg5[%c1_81, %c0_82, %c0_83] : memref<2x1x32xf32, #tpu.memory_space<vmem>>, vector<1x1x32xf32>
    %245 = vector.shape_cast %244 : vector<1x1x32xf32> to vector<1x32xf32>
    %246 = vector.broadcast %245 : vector<1x32xf32> to vector<16x32xf32>
    %247 = arith.addf %243, %246 : vector<16x32xf32>
    %248 = arith.truncf %247 : vector<16x32xf32> to vector<16x32xbf16>
    %c1_84 = arith.constant 1 : index
    %c0_85 = arith.constant 0 : index
    %c0_86 = arith.constant 0 : index
    %249 = vector.load %arg6[%c1_84, %c0_85, %c0_86] : memref<2x32x128xbf16, #tpu.memory_space<vmem>>, vector<1x32x128xbf16>
    %250 = vector.shape_cast %249 : vector<1x32x128xbf16> to vector<32x128xbf16>
    %cst_87 = arith.constant dense<0.000000e+00> : vector<16x128xf32>
    %251 = tpu.matmul %248, %250, %cst_87 {dimension_numbers = #tpu.dot_dimension_numbers<[1], [0], [0], [1], [0, 0, 1, 1], [], []>} : vector<16x32xbf16>, vector<32x128xbf16>, vector<16x128xf32> -> vector<16x128xf32>
    %c1_88 = arith.constant 1 : index
    %c0_89 = arith.constant 0 : index
    %c0_90 = arith.constant 0 : index
    %252 = vector.load %arg7[%c1_88, %c0_89, %c0_90] : memref<2x1x128xf32, #tpu.memory_space<vmem>>, vector<1x1x128xf32>
    %253 = vector.shape_cast %252 : vector<1x1x128xf32> to vector<1x128xf32>
    %254 = vector.broadcast %253 : vector<1x128xf32> to vector<16x128xf32>
    %255 = arith.addf %251, %254 : vector<16x128xf32>
    %cst_91 = arith.constant 0.000000e+00 : f32
    %256 = vector.broadcast %cst_91 : f32 to vector<16x128xf32>
    %257 = arith.maximumf %255, %256 : vector<16x128xf32>
    %258 = arith.truncf %257 : vector<16x128xf32> to vector<16x128xbf16>
    %c1_92 = arith.constant 1 : index
    %c0_93 = arith.constant 0 : index
    %c0_94 = arith.constant 0 : index
    %259 = vector.load %arg8[%c1_92, %c0_93, %c0_94] : memref<2x128x32xbf16, #tpu.memory_space<vmem>>, vector<1x128x32xbf16>
    %260 = vector.shape_cast %259 : vector<1x128x32xbf16> to vector<128x32xbf16>
    %cst_95 = arith.constant dense<0.000000e+00> : vector<16x32xf32>
    %261 = tpu.matmul %258, %260, %cst_95 {dimension_numbers = #tpu.dot_dimension_numbers<[1], [0], [0], [1], [0, 0, 1, 1], [], []>} : vector<16x128xbf16>, vector<128x32xbf16>, vector<16x32xf32> -> vector<16x32xf32>
    %c1_96 = arith.constant 1 : index
    %c0_97 = arith.constant 0 : index
    %c0_98 = arith.constant 0 : index
    %262 = vector.load %arg9[%c1_96, %c0_97, %c0_98] : memref<2x1x32xf32, #tpu.memory_space<vmem>>, vector<1x1x32xf32>
    %263 = vector.shape_cast %262 : vector<1x1x32xf32> to vector<1x32xf32>
    %264 = vector.broadcast %263 : vector<1x32xf32> to vector<16x32xf32>
    %265 = arith.addf %261, %264 : vector<16x32xf32>
    %cst_99 = arith.constant 0.000000e+00 : f32
    %266 = vector.broadcast %cst_99 : f32 to vector<16x32xf32>
    %267 = arith.maximumf %265, %266 : vector<16x32xf32>
    %268 = arith.truncf %267 : vector<16x32xf32> to vector<16x32xbf16>
    %c0_100 = arith.constant 0 : index
    %c0_101 = arith.constant 0 : index
    %269 = vector.load %arg10[%c0_100, %c0_101] : memref<32x128xbf16, #tpu.memory_space<vmem>>, vector<32x128xbf16>
    %cst_102 = arith.constant dense<0.000000e+00> : vector<16x128xf32>
    %270 = tpu.matmul %268, %269, %cst_102 {dimension_numbers = #tpu.dot_dimension_numbers<[1], [0], [0], [1], [0, 0, 1, 1], [], []>} : vector<16x32xbf16>, vector<32x128xbf16>, vector<16x128xf32> -> vector<16x128xf32>
    %c0_103 = arith.constant 0 : index
    %c0_104 = arith.constant 0 : index
    %271 = vector.load %arg11[%c0_103, %c0_104] : memref<1x128xf32, #tpu.memory_space<vmem>>, vector<1x128xf32>
    %272 = vector.broadcast %271 : vector<1x128xf32> to vector<16x128xf32>
    %273 = arith.addf %270, %272 : vector<16x128xf32>
    %c0_105 = arith.constant 0 : index
    %c0_106 = arith.constant 0 : index
    %274 = vector.load %arg12[%c0_105, %c0_106] : memref<16x128xf32, #tpu.memory_space<vmem>>, vector<16x128xf32>
    tpu.vector_store %arg12[%c0_105, %c0_106], %273 {strides = array<i32>} : memref<16x128xf32, #tpu.memory_space<vmem>>, vector<16x128xf32>,
    return
  }
}

</mosaic_0001>

<llo_original>
// kernel: tpu_custom_call.1
$region0: #{tpu_custom_call.1}
  #allocation0 [shape = 'u32[]', space=smem, size = 0x4, offset = 0x4, fixed_abs, tag = 'smem constant byte address 0x4 - core index']
  #allocation1 [shape = 'u32[72,128]{1,0:T(1,128)}', space=vmem, size = 0x9000, scoped, tag = 'internal scratch']
  %s0 = inlined_call_operand.vmem [shape: s32[16,1], index: 0, kind: input, shape index: {}]
  %s1 = inlined_call_operand.vmem [shape: f32[128,32], index: 1, kind: input, shape index: {}]
  %s2 = inlined_call_operand.vmem [shape: f32[8,32], index: 2, kind: input, shape index: {}]
  %s3 = inlined_call_operand.vmem [shape: bf16[2,32,96], index: 3, kind: input, shape index: {}]
  %s4 = inlined_call_operand.vmem [shape: bf16[2,32,32], index: 4, kind: input, shape index: {}]
  %s5 = inlined_call_operand.vmem [shape: f32[2,1,32], index: 5, kind: input, shape index: {}]
  %s6 = inlined_call_operand.vmem [shape: bf16[2,32,128], index: 6, kind: input, shape index: {}]
  %s7 = inlined_call_operand.vmem [shape: f32[2,1,128], index: 7, kind: input, shape index: {}]
  %s8 = inlined_call_operand.vmem [shape: bf16[2,128,32], index: 8, kind: input, shape index: {}]
  %s9 = inlined_call_operand.vmem [shape: f32[2,1,32], index: 9, kind: input, shape index: {}]
  %s10 = inlined_call_operand.vmem [shape: bf16[32,128], index: 10, kind: input, shape index: {}]
  %s11 = inlined_call_operand.vmem [shape: f32[1,128], index: 11, kind: input, shape index: {}]
  %s12 = inlined_call_operand.hbm [shape: f32[16,128], index: 12, kind: output, shape index: {}]
  %s13 = sld [smem:[#allocation0]]
  $region58: #{tpu_custom_call.1} parent=0
    _
  %s15 = ssub.s32 1, %s13
  %s16 = scalar_select 0, %s15, %s13
  $region1: #{tpu_custom_call.1} parent=0
    #allocation2 [shape = 'u8[8192]{0}', space=vmem, size = 0x2000, scoped, tag = 'output window, operand 0, single buffered']
    #allocation3 [shape = 's32[1]{0}', space=sflag, size = 0x4, scoped, tag = 'scoped memory for tpu_custom_call.1']
    %17 = vsyncpa [#allocation3], 0
    // Predicated region
    $region2: #{tpu_custom_call.1} parent=1 // pred_check
      _
    $region3: #{tpu_custom_call.1} parent=1 // pred_check_branch
      %19 = sbr.rel (0) target = $region5
    $region4: #{tpu_custom_call.1} parent=1 // pred_region
      _
    $region5: #{tpu_custom_call.1} parent=1 // pred_fallthru
      _
    // Predicated region
    $region6: #{tpu_custom_call.1} parent=1 // pred_check
      _
    $region7: #{tpu_custom_call.1} parent=1 // pred_check_branch
      %21 = sbr.rel (0) target = $region9
    $region8: #{tpu_custom_call.1} parent=1 // pred_region
      _
    $region9: #{tpu_custom_call.1} parent=1 // pred_fallthru
      _
    // Predicated region
    $region10: #{tpu_custom_call.1} parent=1 // pred_check
      _
    $region11: #{tpu_custom_call.1} parent=1 // pred_check_branch
      %23 = sbr.rel (0) target = $region13
    $region12: #{tpu_custom_call.1} parent=1 // pred_region
      _
    $region13: #{tpu_custom_call.1} parent=1 // pred_fallthru
      _
    // Predicated region
    $region14: #{tpu_custom_call.1} parent=1 // pred_check
      _
    $region15: #{tpu_custom_call.1} parent=1 // pred_check_branch
      %25 = sbr.rel (0) target = $region17
    $region16: #{tpu_custom_call.1} parent=1 // pred_region
      _
    $region17: #{tpu_custom_call.1} parent=1 // pred_fallthru
      _
    // Predicated region
    $region18: #{tpu_custom_call.1} parent=1 // pred_check
      _
    $region19: #{tpu_custom_call.1} parent=1 // pred_check_branch
      %27 = sbr.rel (0) target = $region21
    $region20: #{tpu_custom_call.1} parent=1 // pred_region
      _
    $region21: #{tpu_custom_call.1} parent=1 // pred_fallthru
      _
    // Predicated region
    $region22: #{tpu_custom_call.1} parent=1 // pred_check
      _
    $region23: #{tpu_custom_call.1} parent=1 // pred_check_branch
      %29 = sbr.rel (0) target = $region25
    $region24: #{tpu_custom_call.1} parent=1 // pred_region
      _
    $region25: #{tpu_custom_call.1} parent=1 // pred_fallthru
      _
    // Predicated region
    $region26: #{tpu_custom_call.1} parent=1 // pred_check
      _
    $region27: #{tpu_custom_call.1} parent=1 // pred_check_branch
      %31 = sbr.rel (0) target = $region29
    $region28: #{tpu_custom_call.1} parent=1 // pred_region
      _
    $region29: #{tpu_custom_call.1} parent=1 // pred_fallthru
      _
    // Predicated region
    $region30: #{tpu_custom_call.1} parent=1 // pred_check
      _
    $region31: #{tpu_custom_call.1} parent=1 // pred_check_branch
      %33 = sbr.rel (0) target = $region33
    $region32: #{tpu_custom_call.1} parent=1 // pred_region
      _
    $region33: #{tpu_custom_call.1} parent=1 // pred_fallthru
      _
    // Predicated region
    $region34: #{tpu_custom_call.1} parent=1 // pred_check
      _
    $region35: #{tpu_custom_call.1} parent=1 // pred_check_branch
      %35 = sbr.rel (0) target = $region37
    $region36: #{tpu_custom_call.1} parent=1 // pred_region
      _
    $region37: #{tpu_custom_call.1} parent=1 // pred_fallthru
      _
    // Predicated region
    $region38: #{tpu_custom_call.1} parent=1 // pred_check
      _
    $region39: #{tpu_custom_call.1} parent=1 // pred_check_branch
      %37 = sbr.rel (0) target = $region41
    $region40: #{tpu_custom_call.1} parent=1 // pred_region
      _
    $region41: #{tpu_custom_call.1} parent=1 // pred_fallthru
      _
    // Predicated region
    $region42: #{tpu_custom_call.1} parent=1 // pred_check
      _
    $region43: #{tpu_custom_call.1} parent=1 // pred_check_branch
      %39 = sbr.rel (0) target = $region45
    $region44: #{tpu_custom_call.1} parent=1 // pred_region
      _
    $region45: #{tpu_custom_call.1} parent=1 // pred_fallthru
      _
    // Predicated region
    $region46: #{tpu_custom_call.1} parent=1 // pred_check
      _
    $region47: #{tpu_custom_call.1} parent=1 // pred_check_branch
      %41 = sbr.rel (0) target = $region49
    $region48: #{tpu_custom_call.1} parent=1 // pred_region
      _
    $region49: #{tpu_custom_call.1} parent=1 // pred_fallthru
      _
    %v43 = vld [vmem:[%s0] sm:$0xff]
    %v44 = vld [vmem:[%s0 + $0x8] sm:$0xff]
    %v45 = vlaneseq
    %v46 = vand.u32 %v45, 127
    %47 = vset.pattern.permute.xlu0 0
    %48 = vperm.xlu0 %47, %v43
    %v49 = vpop.permute.xlu0 %48
    %50 = vset.pattern.permute.xlu0 0
    %51 = vperm.xlu0 %50, %v44
    %v52 = vpop.permute.xlu0 %51
    %vm53 = vcmp.eq.s32.totalorder %v46, %v49
    %vm54 = vcmp.eq.s32.totalorder %v46, %v52
    %v55 = vsel %vm53, 1, 0
    %v56 = vsel %vm54, 1, 0
    %v57 = vcvt.s32.f32 %v55
    %v58 = vcvt.s32.f32 %v56
    %v59 = vld [vmem:[%s1] sm:$0xff]
    %v60 = vld [vmem:[%s1 + $0x8] sm:$0xff]
    %v61 = vld [vmem:[%s1 + $0x10] sm:$0xff]
    %v62 = vld [vmem:[%s1 + $0x18] sm:$0xff]
    %v63 = vld [vmem:[%s1 + $0x20] sm:$0xff]
    %v64 = vld [vmem:[%s1 + $0x28] sm:$0xff]
    %v65 = vld [vmem:[%s1 + $0x30] sm:$0xff]
    %v66 = vld [vmem:[%s1 + $0x38] sm:$0xff]
    %v67 = vld [vmem:[%s1 + $0x40] sm:$0xff]
    %v68 = vld [vmem:[%s1 + $0x48] sm:$0xff]
    %v69 = vld [vmem:[%s1 + $0x50] sm:$0xff]
    %v70 = vld [vmem:[%s1 + $0x58] sm:$0xff]
    %v71 = vld [vmem:[%s1 + $0x60] sm:$0xff]
    %v72 = vld [vmem:[%s1 + $0x68] sm:$0xff]
    %v73 = vld [vmem:[%s1 + $0x70] sm:$0xff]
    %v74 = vld [vmem:[%s1 + $0x78] sm:$0xff]
    %v75 = vld [vmem:[%s2] sm:$0xff]
    %76 = vmatpush.msra.mxu0 %v74
    %77 = vmatpush.msra.mxu0 %v73
    %78 = vmatpush.msra.mxu0 %v72
    %79 = vmatpush.msra.mxu0 %v71
    %80 = vmatpush.msra.mxu0 %v70
    %81 = vmatpush.msra.mxu0 %v69
    %82 = vmatpush.msra.mxu0 %v68
    %83 = vmatpush.msra.mxu0 %v67
    %84 = vmatpush.msra.mxu0 %v66
    %85 = vmatpush.msra.mxu0 %v65
    %86 = vmatpush.msra.mxu0 %v64
    %87 = vmatpush.msra.mxu0 %v63
    %88 = vmatpush.msra.mxu0 %v62
    %89 = vmatpush.msra.mxu0 %v61
    %90 = vmatpush.msra.mxu0 %v60
    %91 = vmatpush.msra.mxu0 %v59
    %92 = vmatmul.f32.gmra.mxu0 %v57
    %v93 = vpop.f32.mrf.mxu0
    %v94 = vadd.f32 %v75, %v93
    %95 = vmatmul.f32.gmra.mxu0 %v58
    %v96 = vpop.f32.mrf.mxu0
    %v97 = vadd.f32 %v75, %v96
    %98 = vdwg.mxu0
    %v99 = vlaneseq
    %v100 = vshrl.u32 %v99, 7
    %vm101 = vcmp.ge.s32.totalorder %v100, %v46
    %v102 = vsel %vm101, 0.0, -1e+30
    %v103 = vpack.c.bf16 %v97, %v94
    %v104 = vld [vmem:[%s3] sm:$0xf]
    %v105 = vld [vmem:[%s3 + $0x4] sm:$0xf]
    %v106 = vld [vmem:[%s3 + $0x8] sm:$0xf]
    %v107 = vld [vmem:[%s3 + $0xc] sm:$0xf]
    %v112 = vunpack.c.l.b16 %v104
    %v113 = vunpack.c.l.b16 %v105
    %v114 = vunpack.c.l.b16 %v106
    %v115 = vunpack.c.l.b16 %v107
    %v116 = vpack.c.b16 %v113, %v112
    %v117 = vpack.c.b16 %v115, %v114
    %vm120 = vcmask 261120
    %v122 = vsel %vm120, %v103, 0
    %124 = vmatpush.bf16.msra.mxu0 0
    %125 = vmatpush.bf16.msra.mxu0 0
    %126 = vmatpush.bf16.msra.mxu0 0
    %127 = vmatpush.bf16.msra.mxu0 0
    %128 = vmatpush.bf16.msra.mxu0 0
    %129 = vmatpush.bf16.msra.mxu0 0
    %130 = vmatpush.bf16.msra.mxu0 %v117
    %131 = vmatpush.bf16.msra.mxu0 %v116
    %132 = vmatmul.bf16.gmra.mxu0 %v122
    %v133 = vpop.f32.mrf.mxu0
    %v134 = vadd.f32 0.0, %v133
    %v135 = vpop.f32.mrf.mxu0
    %v136 = vadd.f32 0.0, %v135
    %137 = vdwg.mxu0
    %139 = vrot.lane.b32.xlu0 %v134, 96
    %v140 = vpop.permute.xlu0 %139
    %vm141 = vcmask 64512
    %v142 = vsel %vm141, %v134, 0
    %v144 = vsel %vm141, %v140, 0
    %146 = vmatpush.xpose.msra.mxu0 0.0
    %147 = vmatpush.xpose.msra.mxu0 0.0
    %148 = vmatpush.xpose.msra.mxu0 0.0
    %149 = vmatpush.xpose.msra.mxu0 0.0
    %150 = vmatpush.xpose.msra.mxu0 0.0
    %151 = vmatpush.xpose.msra.mxu0 0.0
    %152 = vmatpush.xpose.msra.mxu0 0.0
    %153 = vmatpush.xpose.msra.mxu0 0.0
    %154 = vmatpush.xpose.msra.mxu0 0.0
    %155 = vmatpush.xpose.msra.mxu0 0.0
    %156 = vmatpush.xpose.msra.mxu0 0.0
    %157 = vmatpush.xpose.msra.mxu0 0.0
    %158 = vmatpush.xpose.msra.mxu0 0.0
    %159 = vmatpush.xpose.msra.mxu0 0.0
    %160 = vmatpush.xpose.msra.mxu0 0.0
    %161 = vmatpush.xpose.msra.mxu0 %v144
    %162 = vmatmul.f32.gmra.mxu0 %v142
    %v163 = vpop.f32.mrf.mxu0
    %v164 = vadd.f32 0.0, %v163
    %165 = vdwg.mxu0
    %167 = vrot.lane.b32.xlu0 %v136, 96
    %v168 = vpop.permute.xlu0 %167
    %v169 = vsel %vm141, %v136, 0
    %v171 = vsel %vm141, %v168, 0
    %173 = vmatpush.xpose.msra.mxu0 0.0
    %174 = vmatpush.xpose.msra.mxu0 0.0
    %175 = vmatpush.xpose.msra.mxu0 0.0
    %176 = vmatpush.xpose.msra.mxu0 0.0
    %177 = vmatpush.xpose.msra.mxu0 0.0
    %178 = vmatpush.xpose.msra.mxu0 0.0
    %179 = vmatpush.xpose.msra.mxu0 0.0
    %180 = vmatpush.xpose.msra.mxu0 0.0
    %181 = vmatpush.xpose.msra.mxu0 0.0
    %182 = vmatpush.xpose.msra.mxu0 0.0
    %183 = vmatpush.xpose.msra.mxu0 0.0
    %184 = vmatpush.xpose.msra.mxu0 0.0
    %185 = vmatpush.xpose.msra.mxu0 0.0
    %186 = vmatpush.xpose.msra.mxu0 0.0
    %187 = vmatpush.xpose.msra.mxu0 0.0
    %188 = vmatpush.xpose.msra.mxu0 %v171
    %189 = vmatmul.f32.gmra.mxu0 %v169
    %v190 = vpop.f32.mrf.mxu0
    %v191 = vadd.f32 0.0, %v190
    %192 = vdwg.mxu0
    %v193 = vmul.f32 %v164, 0.17677669
    %v194 = vmul.f32 %v191, 0.17677669
    %v195 = vadd.f32 %v193, %v102
    %v196 = vadd.f32 %v194, %v102
    %v197 = vsel %vm141, %v195, -inf
    %198 = vmax.xlane.f32.xlu0 %v197
    %v199 = vpop.xlane.xlu0 %198
    %v200 = vsel %vm141, %v196, -inf
    %201 = vmax.xlane.f32.xlu0 %v200
    %v202 = vpop.xlane.xlu0 %201
    %v203 = vsub.f32 %v195, %v199
    %v204 = vsub.f32 %v196, %v202
    %v205 = vmul.f32 %v203, 1.442695
    %v206 = vpow.pop %v205
    %v207 = vmul.f32 %v204, 1.442695
    %v208 = vpow.pop %v207
    %v209 = vsel %vm141, %v206, 0.0
    %210 = vadd.xlane.f32.xlu0 %v209
    %v211 = vpop.xlane.xlu0 %210
    %v212 = vsel %vm141, %v208, 0.0
    %213 = vadd.xlane.f32.xlu0 %v212
    %v214 = vpop.xlane.xlu0 %213
    %v215 = vrcp.pop %v211
    %v216 = vrcp.pop %v214
    %v217 = vmul.f32 %v206, %v215
    %v218 = vmul.f32 %v208, %v216
    %219 = vrot.lane.b32.xlu0 %v134, 64
    %v220 = vpop.permute.xlu0 %219
    %v223 = vsel %vm141, %v217, 0
    %225 = vmatpush.msra.mxu0 0.0
    %226 = vmatpush.msra.mxu0 0.0
    %227 = vmatpush.msra.mxu0 0.0
    %228 = vmatpush.msra.mxu0 0.0
    %229 = vmatpush.msra.mxu0 0.0
    %230 = vmatpush.msra.mxu0 0.0
    %231 = vmatpush.msra.mxu0 0.0
    %232 = vmatpush.msra.mxu0 0.0
    %233 = vmatpush.msra.mxu0 0.0
    %234 = vmatpush.msra.mxu0 0.0
    %235 = vmatpush.msra.mxu0 0.0
    %236 = vmatpush.msra.mxu0 0.0
    %237 = vmatpush.msra.mxu0 0.0
    %238 = vmatpush.msra.mxu0 0.0
    %239 = vmatpush.msra.mxu0 0.0
    %240 = vmatpush.msra.mxu0 %v220
    %241 = vmatmul.f32.gmra.mxu0 %v223
    %v242 = vpop.f32.mrf.mxu0
    %v243 = vadd.f32 0.0, %v242
    %244 = vdwg.mxu0
    %245 = vrot.lane.b32.xlu0 %v136, 64
    %v246 = vpop.permute.xlu0 %245
    %v249 = vsel %vm141, %v218, 0
    %251 = vmatpush.msra.mxu0 0.0
    %252 = vmatpush.msra.mxu0 0.0
    %253 = vmatpush.msra.mxu0 0.0
    %254 = vmatpush.msra.mxu0 0.0
    %255 = vmatpush.msra.mxu0 0.0
    %256 = vmatpush.msra.mxu0 0.0
    %257 = vmatpush.msra.mxu0 0.0
    %258 = vmatpush.msra.mxu0 0.0
    %259 = vmatpush.msra.mxu0 0.0
    %260 = vmatpush.msra.mxu0 0.0
    %261 = vmatpush.msra.mxu0 0.0
    %262 = vmatpush.msra.mxu0 0.0
    %263 = vmatpush.msra.mxu0 0.0
    %264 = vmatpush.msra.mxu0 0.0
    %265 = vmatpush.msra.mxu0 0.0
    %266 = vmatpush.msra.mxu0 %v246
    %267 = vmatmul.f32.gmra.mxu0 %v249
    %v268 = vpop.f32.mrf.mxu0
    %v269 = vadd.f32 0.0, %v268
    %270 = vdwg.mxu0
    %271 = vrot.lane.b32.xlu0 %v134, 120
    %v272 = vpop.permute.xlu0 %271
    %273 = vrot.lane.b32.xlu0 %v134, 88
    %v274 = vpop.permute.xlu0 %273
    %v275 = vsel %vm141, %v272, 0
    %v277 = vsel %vm141, %v274, 0
    %279 = vmatpush.xpose.msra.mxu0 0.0
    %280 = vmatpush.xpose.msra.mxu0 0.0
    %281 = vmatpush.xpose.msra.mxu0 0.0
    %282 = vmatpush.xpose.msra.mxu0 0.0
    %283 = vmatpush.xpose.msra.mxu0 0.0
    %284 = vmatpush.xpose.msra.mxu0 0.0
    %285 = vmatpush.xpose.msra.mxu0 0.0
    %286 = vmatpush.xpose.msra.mxu0 0.0
    %287 = vmatpush.xpose.msra.mxu0 0.0
    %288 = vmatpush.xpose.msra.mxu0 0.0
    %289 = vmatpush.xpose.msra.mxu0 0.0
    %290 = vmatpush.xpose.msra.mxu0 0.0
    %291 = vmatpush.xpose.msra.mxu0 0.0
    %292 = vmatpush.xpose.msra.mxu0 0.0
    %293 = vmatpush.xpose.msra.mxu0 0.0
    %294 = vmatpush.xpose.msra.mxu0 %v277
    %295 = vmatmul.f32.gmra.mxu0 %v275
    %v296 = vpop.f32.mrf.mxu0
    %v297 = vadd.f32 0.0, %v296
    %298 = vdwg.mxu0
    %299 = vrot.lane.b32.xlu0 %v136, 120
    %v300 = vpop.permute.xlu0 %299
    %301 = vrot.lane.b32.xlu0 %v136, 88
    %v302 = vpop.permute.xlu0 %301
    %v303 = vsel %vm141, %v300, 0
    %v305 = vsel %vm141, %v302, 0
    %307 = vmatpush.xpose.msra.mxu0 0.0
    %308 = vmatpush.xpose.msra.mxu0 0.0
    %309 = vmatpush.xpose.msra.mxu0 0.0
    %310 = vmatpush.xpose.msra.mxu0 0.0
    %311 = vmatpush.xpose.msra.mxu0 0.0
    %312 = vmatpush.xpose.msra.mxu0 0.0
    %313 = vmatpush.xpose.msra.mxu0 0.0
    %314 = vmatpush.xpose.msra.mxu0 0.0
    %315 = vmatpush.xpose.msra.mxu0 0.0
    %316 = vmatpush.xpose.msra.mxu0 0.0
    %317 = vmatpush.xpose.msra.mxu0 0.0
    %318 = vmatpush.xpose.msra.mxu0 0.0
    %319 = vmatpush.xpose.msra.mxu0 0.0
    %320 = vmatpush.xpose.msra.mxu0 0.0
    %321 = vmatpush.xpose.msra.mxu0 0.0
    %322 = vmatpush.xpose.msra.mxu0 %v305
    %323 = vmatmul.f32.gmra.mxu0 %v303
    %v324 = vpop.f32.mrf.mxu0
    %v325 = vadd.f32 0.0, %v324
    %326 = vdwg.mxu0
    %v327 = vmul.f32 %v297, 0.17677669
    %v328 = vmul.f32 %v325, 0.17677669
    %v329 = vadd.f32 %v327, %v102
    %v330 = vadd.f32 %v328, %v102
    %v331 = vsel %vm141, %v329, -inf
    %332 = vmax.xlane.f32.xlu0 %v331
    %v333 = vpop.xlane.xlu0 %332
    %v334 = vsel %vm141, %v330, -inf
    %335 = vmax.xlane.f32.xlu0 %v334
    %v336 = vpop.xlane.xlu0 %335
    %v337 = vsub.f32 %v329, %v333
    %v338 = vsub.f32 %v330, %v336
    %v339 = vmul.f32 %v337, 1.442695
    %v340 = vpow.pop %v339
    %v341 = vmul.f32 %v338, 1.442695
    %v342 = vpow.pop %v341
    %v343 = vsel %vm141, %v340, 0.0
    %344 = vadd.xlane.f32.xlu0 %v343
    %v345 = vpop.xlane.xlu0 %344
    %v346 = vsel %vm141, %v342, 0.0
    %347 = vadd.xlane.f32.xlu0 %v346
    %v348 = vpop.xlane.xlu0 %347
    %v349 = vrcp.pop %v345
    %v350 = vrcp.pop %v348
    %v351 = vmul.f32 %v340, %v349
    %v352 = vmul.f32 %v342, %v350
    %353 = vrot.lane.b32.xlu0 %v134, 56
    %v354 = vpop.permute.xlu0 %353
    %v357 = vsel %vm141, %v351, 0
    %359 = vmatpush.msra.mxu0 0.0
    %360 = vmatpush.msra.mxu0 0.0
    %361 = vmatpush.msra.mxu0 0.0
    %362 = vmatpush.msra.mxu0 0.0
    %363 = vmatpush.msra.mxu0 0.0
    %364 = vmatpush.msra.mxu0 0.0
    %365 = vmatpush.msra.mxu0 0.0
    %366 = vmatpush.msra.mxu0 0.0
    %367 = vmatpush.msra.mxu0 0.0
    %368 = vmatpush.msra.mxu0 0.0
    %369 = vmatpush.msra.mxu0 0.0
    %370 = vmatpush.msra.mxu0 0.0
    %371 = vmatpush.msra.mxu0 0.0
    %372 = vmatpush.msra.mxu0 0.0
    %373 = vmatpush.msra.mxu0 0.0
    %374 = vmatpush.msra.mxu0 %v354
    %375 = vmatmul.f32.gmra.mxu0 %v357
    %v376 = vpop.f32.mrf.mxu0
    %v377 = vadd.f32 0.0, %v376
    %378 = vdwg.mxu0
    %379 = vrot.lane.b32.xlu0 %v136, 56
    %v380 = vpop.permute.xlu0 %379
    %v383 = vsel %vm141, %v352, 0
    %385 = vmatpush.msra.mxu0 0.0
    %386 = vmatpush.msra.mxu0 0.0
    %387 = vmatpush.msra.mxu0 0.0
    %388 = vmatpush.msra.mxu0 0.0
    %389 = vmatpush.msra.mxu0 0.0
    %390 = vmatpush.msra.mxu0 0.0
    %391 = vmatpush.msra.mxu0 0.0
    %392 = vmatpush.msra.mxu0 0.0
    %393 = vmatpush.msra.mxu0 0.0
    %394 = vmatpush.msra.mxu0 0.0
    %395 = vmatpush.msra.mxu0 0.0
    %396 = vmatpush.msra.mxu0 0.0
    %397 = vmatpush.msra.mxu0 0.0
    %398 = vmatpush.msra.mxu0 0.0
    %399 = vmatpush.msra.mxu0 0.0
    %400 = vmatpush.msra.mxu0 %v380
    %401 = vmatmul.f32.gmra.mxu0 %v383
    %v402 = vpop.f32.mrf.mxu0
    %v403 = vadd.f32 0.0, %v402
    %404 = vdwg.mxu0
    %405 = vrot.lane.b32.xlu0 %v134, 112
    %v406 = vpop.permute.xlu0 %405
    %407 = vrot.lane.b32.xlu0 %v134, 80
    %v408 = vpop.permute.xlu0 %407
    %v409 = vsel %vm141, %v406, 0
    %v411 = vsel %vm141, %v408, 0
    %413 = vmatpush.xpose.msra.mxu0 0.0
    %414 = vmatpush.xpose.msra.mxu0 0.0
    %415 = vmatpush.xpose.msra.mxu0 0.0
    %416 = vmatpush.xpose.msra.mxu0 0.0
    %417 = vmatpush.xpose.msra.mxu0 0.0
    %418 = vmatpush.xpose.msra.mxu0 0.0
    %419 = vmatpush.xpose.msra.mxu0 0.0
    %420 = vmatpush.xpose.msra.mxu0 0.0
    %421 = vmatpush.xpose.msra.mxu0 0.0
    %422 = vmatpush.xpose.msra.mxu0 0.0
    %423 = vmatpush.xpose.msra.mxu0 0.0
    %424 = vmatpush.xpose.msra.mxu0 0.0
    %425 = vmatpush.xpose.msra.mxu0 0.0
    %426 = vmatpush.xpose.msra.mxu0 0.0
    %427 = vmatpush.xpose.msra.mxu0 0.0
    %428 = vmatpush.xpose.msra.mxu0 %v411
    %429 = vmatmul.f32.gmra.mxu0 %v409
    %v430 = vpop.f32.mrf.mxu0
    %v431 = vadd.f32 0.0, %v430
    %432 = vdwg.mxu0
    %433 = vrot.lane.b32.xlu0 %v136, 112
    %v434 = vpop.permute.xlu0 %433
    %435 = vrot.lane.b32.xlu0 %v136, 80
    %v436 = vpop.permute.xlu0 %435
    %v437 = vsel %vm141, %v434, 0
    %v439 = vsel %vm141, %v436, 0
    %441 = vmatpush.xpose.msra.mxu0 0.0
    %442 = vmatpush.xpose.msra.mxu0 0.0
    %443 = vmatpush.xpose.msra.mxu0 0.0
    %444 = vmatpush.xpose.msra.mxu0 0.0
    %445 = vmatpush.xpose.msra.mxu0 0.0
    %446 = vmatpush.xpose.msra.mxu0 0.0
    %447 = vmatpush.xpose.msra.mxu0 0.0
    %448 = vmatpush.xpose.msra.mxu0 0.0
    %449 = vmatpush.xpose.msra.mxu0 0.0
    %450 = vmatpush.xpose.msra.mxu0 0.0
    %451 = vmatpush.xpose.msra.mxu0 0.0
    %452 = vmatpush.xpose.msra.mxu0 0.0
    %453 = vmatpush.xpose.msra.mxu0 0.0
    %454 = vmatpush.xpose.msra.mxu0 0.0
    %455 = vmatpush.xpose.msra.mxu0 0.0
    %456 = vmatpush.xpose.msra.mxu0 %v439
    %457 = vmatmul.f32.gmra.mxu0 %v437
    %v458 = vpop.f32.mrf.mxu0
    %v459 = vadd.f32 0.0, %v458
    %460 = vdwg.mxu0
    %v461 = vmul.f32 %v431, 0.17677669
    %v462 = vmul.f32 %v459, 0.17677669
    %v463 = vadd.f32 %v461, %v102
    %v464 = vadd.f32 %v462, %v102
    %v465 = vsel %vm141, %v463, -inf
    %466 = vmax.xlane.f32.xlu0 %v465
    %v467 = vpop.xlane.xlu0 %466
    %v468 = vsel %vm141, %v464, -inf
    %469 = vmax.xlane.f32.xlu0 %v468
    %v470 = vpop.xlane.xlu0 %469
    %v471 = vsub.f32 %v463, %v467
    %v472 = vsub.f32 %v464, %v470
    %v473 = vmul.f32 %v471, 1.442695
    %v474 = vpow.pop %v473
    %v475 = vmul.f32 %v472, 1.442695
    %v476 = vpow.pop %v475
    %v477 = vsel %vm141, %v474, 0.0
    %478 = vadd.xlane.f32.xlu0 %v477
    %v479 = vpop.xlane.xlu0 %478
    %v480 = vsel %vm141, %v476, 0.0
    %481 = vadd.xlane.f32.xlu0 %v480
    %v482 = vpop.xlane.xlu0 %481
    %v483 = vrcp.pop %v479
    %v484 = vrcp.pop %v482
    %v485 = vmul.f32 %v474, %v483
    %v486 = vmul.f32 %v476, %v484
    %487 = vrot.lane.b32.xlu0 %v134, 48
    %v488 = vpop.permute.xlu0 %487
    %v491 = vsel %vm141, %v485, 0
    %493 = vmatpush.msra.mxu0 0.0
    %494 = vmatpush.msra.mxu0 0.0
    %495 = vmatpush.msra.mxu0 0.0
    %496 = vmatpush.msra.mxu0 0.0
    %497 = vmatpush.msra.mxu0 0.0
    %498 = vmatpush.msra.mxu0 0.0
    %499 = vmatpush.msra.mxu0 0.0
    %500 = vmatpush.msra.mxu0 0.0
    %501 = vmatpush.msra.mxu0 0.0
    %502 = vmatpush.msra.mxu0 0.0
    %503 = vmatpush.msra.mxu0 0.0
    %504 = vmatpush.msra.mxu0 0.0
    %505 = vmatpush.msra.mxu0 0.0
    %506 = vmatpush.msra.mxu0 0.0
    %507 = vmatpush.msra.mxu0 0.0
    %508 = vmatpush.msra.mxu0 %v488
    %509 = vmatmul.f32.gmra.mxu0 %v491
    %v510 = vpop.f32.mrf.mxu0
    %v511 = vadd.f32 0.0, %v510
    %512 = vdwg.mxu0
    %513 = vrot.lane.b32.xlu0 %v136, 48
    %v514 = vpop.permute.xlu0 %513
    %v517 = vsel %vm141, %v486, 0
    %519 = vmatpush.msra.mxu0 0.0
    %520 = vmatpush.msra.mxu0 0.0
    %521 = vmatpush.msra.mxu0 0.0
    %522 = vmatpush.msra.mxu0 0.0
    %523 = vmatpush.msra.mxu0 0.0
    %524 = vmatpush.msra.mxu0 0.0
    %525 = vmatpush.msra.mxu0 0.0
    %526 = vmatpush.msra.mxu0 0.0
    %527 = vmatpush.msra.mxu0 0.0
    %528 = vmatpush.msra.mxu0 0.0
    %529 = vmatpush.msra.mxu0 0.0
    %530 = vmatpush.msra.mxu0 0.0
    %531 = vmatpush.msra.mxu0 0.0
    %532 = vmatpush.msra.mxu0 0.0
    %533 = vmatpush.msra.mxu0 0.0
    %534 = vmatpush.msra.mxu0 %v514
    %535 = vmatmul.f32.gmra.mxu0 %v517
    %v536 = vpop.f32.mrf.mxu0
    %v537 = vadd.f32 0.0, %v536
    %538 = vdwg.mxu0
    %539 = vrot.lane.b32.xlu0 %v134, 104
    %v540 = vpop.permute.xlu0 %539
    %541 = vrot.lane.b32.xlu0 %v134, 72
    %v542 = vpop.permute.xlu0 %541
    %v543 = vsel %vm141, %v540, 0
    %v545 = vsel %vm141, %v542, 0
    %547 = vmatpush.xpose.msra.mxu0 0.0
    %548 = vmatpush.xpose.msra.mxu0 0.0
    %549 = vmatpush.xpose.msra.mxu0 0.0
    %550 = vmatpush.xpose.msra.mxu0 0.0
    %551 = vmatpush.xpose.msra.mxu0 0.0
    %552 = vmatpush.xpose.msra.mxu0 0.0
    %553 = vmatpush.xpose.msra.mxu0 0.0
    %554 = vmatpush.xpose.msra.mxu0 0.0
    %555 = vmatpush.xpose.msra.mxu0 0.0
    %556 = vmatpush.xpose.msra.mxu0 0.0
    %557 = vmatpush.xpose.msra.mxu0 0.0
    %558 = vmatpush.xpose.msra.mxu0 0.0
    %559 = vmatpush.xpose.msra.mxu0 0.0
    %560 = vmatpush.xpose.msra.mxu0 0.0
    %561 = vmatpush.xpose.msra.mxu0 0.0
    %562 = vmatpush.xpose.msra.mxu0 %v545
    %563 = vmatmul.f32.gmra.mxu0 %v543
    %v564 = vpop.f32.mrf.mxu0
    %v565 = vadd.f32 0.0, %v564
    %566 = vdwg.mxu0
    %567 = vrot.lane.b32.xlu0 %v136, 104
    %v568 = vpop.permute.xlu0 %567
    %569 = vrot.lane.b32.xlu0 %v136, 72
    %v570 = vpop.permute.xlu0 %569
    %v571 = vsel %vm141, %v568, 0
    %v573 = vsel %vm141, %v570, 0
    %575 = vmatpush.xpose.msra.mxu0 0.0
    %576 = vmatpush.xpose.msra.mxu0 0.0
    %577 = vmatpush.xpose.msra.mxu0 0.0
    %578 = vmatpush.xpose.msra.mxu0 0.0
    %579 = vmatpush.xpose.msra.mxu0 0.0
    %580 = vmatpush.xpose.msra.mxu0 0.0
    %581 = vmatpush.xpose.msra.mxu0 0.0
    %582 = vmatpush.xpose.msra.mxu0 0.0
    %583 = vmatpush.xpose.msra.mxu0 0.0
    %584 = vmatpush.xpose.msra.mxu0 0.0
    %585 = vmatpush.xpose.msra.mxu0 0.0
    %586 = vmatpush.xpose.msra.mxu0 0.0
    %587 = vmatpush.xpose.msra.mxu0 0.0
    %588 = vmatpush.xpose.msra.mxu0 0.0
    %589 = vmatpush.xpose.msra.mxu0 0.0
    %590 = vmatpush.xpose.msra.mxu0 %v573
    %591 = vmatmul.f32.gmra.mxu0 %v571
    %v592 = vpop.f32.mrf.mxu0
    %v593 = vadd.f32 0.0, %v592
    %594 = vdwg.mxu0
    %v595 = vmul.f32 %v565, 0.17677669
    %v596 = vmul.f32 %v593, 0.17677669
    %v597 = vadd.f32 %v595, %v102
    %v598 = vadd.f32 %v596, %v102
    %v599 = vsel %vm141, %v597, -inf
    %600 = vmax.xlane.f32.xlu0 %v599
    %v601 = vpop.xlane.xlu0 %600
    %v602 = vsel %vm141, %v598, -inf
    %603 = vmax.xlane.f32.xlu0 %v602
    %v604 = vpop.xlane.xlu0 %603
    %v605 = vsub.f32 %v597, %v601
    %v606 = vsub.f32 %v598, %v604
    %v607 = vmul.f32 %v605, 1.442695
    %v608 = vpow.pop %v607
    %v609 = vmul.f32 %v606, 1.442695
    %v610 = vpow.pop %v609
    %v611 = vsel %vm141, %v608, 0.0
    %612 = vadd.xlane.f32.xlu0 %v611
    %v613 = vpop.xlane.xlu0 %612
    %v614 = vsel %vm141, %v610, 0.0
    %615 = vadd.xlane.f32.xlu0 %v614
    %v616 = vpop.xlane.xlu0 %615
    %v617 = vrcp.pop %v613
    %v618 = vrcp.pop %v616
    %v619 = vmul.f32 %v608, %v617
    %v620 = vmul.f32 %v610, %v618
    %621 = vrot.lane.b32.xlu0 %v134, 40
    %v622 = vpop.permute.xlu0 %621
    %v625 = vsel %vm141, %v619, 0
    %627 = vmatpush.msra.mxu0 0.0
    %628 = vmatpush.msra.mxu0 0.0
    %629 = vmatpush.msra.mxu0 0.0
    %630 = vmatpush.msra.mxu0 0.0
    %631 = vmatpush.msra.mxu0 0.0
    %632 = vmatpush.msra.mxu0 0.0
    %633 = vmatpush.msra.mxu0 0.0
    %634 = vmatpush.msra.mxu0 0.0
    %635 = vmatpush.msra.mxu0 0.0
    %636 = vmatpush.msra.mxu0 0.0
    %637 = vmatpush.msra.mxu0 0.0
    %638 = vmatpush.msra.mxu0 0.0
    %639 = vmatpush.msra.mxu0 0.0
    %640 = vmatpush.msra.mxu0 0.0
    %641 = vmatpush.msra.mxu0 0.0
    %642 = vmatpush.msra.mxu0 %v622
    %643 = vmatmul.f32.gmra.mxu0 %v625
    %v644 = vpop.f32.mrf.mxu0
    %v645 = vadd.f32 0.0, %v644
    %646 = vdwg.mxu0
    %647 = vrot.lane.b32.xlu0 %v136, 40
    %v648 = vpop.permute.xlu0 %647
    %v651 = vsel %vm141, %v620, 0
    %653 = vmatpush.msra.mxu0 0.0
    %654 = vmatpush.msra.mxu0 0.0
    %655 = vmatpush.msra.mxu0 0.0
    %656 = vmatpush.msra.mxu0 0.0
    %657 = vmatpush.msra.mxu0 0.0
    %658 = vmatpush.msra.mxu0 0.0
    %659 = vmatpush.msra.mxu0 0.0
    %660 = vmatpush.msra.mxu0 0.0
    %661 = vmatpush.msra.mxu0 0.0
    %662 = vmatpush.msra.mxu0 0.0
    %663 = vmatpush.msra.mxu0 0.0
    %664 = vmatpush.msra.mxu0 0.0
    %665 = vmatpush.msra.mxu0 0.0
    %666 = vmatpush.msra.mxu0 0.0
    %667 = vmatpush.msra.mxu0 0.0
    %668 = vmatpush.msra.mxu0 %v648
    %669 = vmatmul.f32.gmra.mxu0 %v651
    %v670 = vpop.f32.mrf.mxu0
    %v671 = vadd.f32 0.0, %v670
    %672 = vdwg.mxu0
    %675 = vrot.lane.b32.xlu0 %v377, 8
    %v676 = vpop.permute.xlu0 %675
    %677 = vrot.lane.b32.xlu0 %v403, 8
    %v678 = vpop.permute.xlu0 %677
    %683 = vrot.lane.b32.xlu0 %v511, 16
    %v684 = vpop.permute.xlu0 %683
    %685 = vrot.lane.b32.xlu0 %v537, 16
    %v686 = vpop.permute.xlu0 %685
    %691 = vrot.lane.b32.xlu0 %v645, 24
    %v692 = vpop.permute.xlu0 %691
    %693 = vrot.lane.b32.xlu0 %v671, 24
    %v694 = vpop.permute.xlu0 %693
    %v697 = vsel %vm141, %v243, %v676
    %v698 = vsel %vm141, %v269, %v678
    %vm699 = vcmask 130048
    %v700 = vsel %vm699, %v697, %v684
    %v701 = vsel %vm699, %v698, %v686
    %vm702 = vcmask 195584
    %v703 = vsel %vm702, %v700, %v692
    %v704 = vsel %vm702, %v701, %v694
    %v705 = vpack.c.bf16 %v704, %v703
    %v706 = vld [vmem:[%s4] sm:$0xf]
    %v707 = vld [vmem:[%s4 + $0x4] sm:$0xf]
    %v708 = vld [vmem:[%s4 + $0x8] sm:$0xf]
    %v709 = vld [vmem:[%s4 + $0xc] sm:$0xf]
    %v710 = vld [vmem:[%s5] sm:$0x1]
    %v712 = vperm.slane %v710, 0
    %v718 = vunpack.c.l.b16 %v706
    %v719 = vunpack.c.l.b16 %v707
    %v720 = vunpack.c.l.b16 %v708
    %v721 = vunpack.c.l.b16 %v709
    %v722 = vpack.c.b16 %v719, %v718
    %v723 = vpack.c.b16 %v721, %v720
    %v727 = vsel %vm120, %v705, 0
    %729 = vmatpush.bf16.msra.mxu0 0
    %730 = vmatpush.bf16.msra.mxu0 0
    %731 = vmatpush.bf16.msra.mxu0 0
    %732 = vmatpush.bf16.msra.mxu0 0
    %733 = vmatpush.bf16.msra.mxu0 0
    %734 = vmatpush.bf16.msra.mxu0 0
    %735 = vmatpush.bf16.msra.mxu0 %v723
    %736 = vmatpush.bf16.msra.mxu0 %v722
    %737 = vmatmul.bf16.gmra.mxu0 %v727
    %v738 = vpop.f32.mrf.mxu0
    %v739 = vadd.f32 %v712, %v738
    %v740 = vpop.f32.mrf.mxu0
    %v741 = vadd.f32 %v712, %v740
    %742 = vdwg.mxu0
    %v743 = vpack.c.bf16 %v741, %v739
    %v744 = vld [vmem:[%s6] sm:$0xf]
    %v745 = vld [vmem:[%s6 + $0x4] sm:$0xf]
    %v746 = vld [vmem:[%s6 + $0x8] sm:$0xf]
    %v747 = vld [vmem:[%s6 + $0xc] sm:$0xf]
    %v748 = vld [vmem:[%s7] sm:$0x1]
    %v750 = vperm.slane %v748, 0
    %v756 = vunpack.c.l.b16 %v744
    %v757 = vunpack.c.l.b16 %v745
    %v758 = vunpack.c.l.b16 %v746
    %v759 = vunpack.c.l.b16 %v747
    %v760 = vpack.c.b16 %v757, %v756
    %v761 = vpack.c.b16 %v759, %v758
    %v765 = vsel %vm120, %v743, 0
    %767 = vmatpush.bf16.msra.mxu0 0
    %768 = vmatpush.bf16.msra.mxu0 0
    %769 = vmatpush.bf16.msra.mxu0 0
    %770 = vmatpush.bf16.msra.mxu0 0
    %771 = vmatpush.bf16.msra.mxu0 0
    %772 = vmatpush.bf16.msra.mxu0 0
    %773 = vmatpush.bf16.msra.mxu0 %v761
    %774 = vmatpush.bf16.msra.mxu0 %v760
    %775 = vmatmul.bf16.gmra.mxu0 %v765
    %v776 = vpop.f32.mrf.mxu0
    %v777 = vadd.f32 %v750, %v776
    %v778 = vpop.f32.mrf.mxu0
    %v779 = vadd.f32 %v750, %v778
    %780 = vdwg.mxu0
    %v781 = vmax.f32 %v777, 0.0
    %v782 = vmax.f32 %v779, 0.0
    %v783 = vpack.c.bf16 %v782, %v781
    %v784 = vld [vmem:[%s8] sm:$0xf]
    %v785 = vld [vmem:[%s8 + $0x4] sm:$0xf]
    %v786 = vld [vmem:[%s8 + $0x8] sm:$0xf]
    %v787 = vld [vmem:[%s8 + $0xc] sm:$0xf]
    %v788 = vld [vmem:[%s8 + $0x10] sm:$0xf]
    %v789 = vld [vmem:[%s8 + $0x14] sm:$0xf]
    %v790 = vld [vmem:[%s8 + $0x18] sm:$0xf]
    %v791 = vld [vmem:[%s8 + $0x1c] sm:$0xf]
    %v792 = vld [vmem:[%s8 + $0x20] sm:$0xf]
    %v793 = vld [vmem:[%s8 + $0x24] sm:$0xf]
    %v794 = vld [vmem:[%s8 + $0x28] sm:$0xf]
    %v795 = vld [vmem:[%s8 + $0x2c] sm:$0xf]
    %v796 = vld [vmem:[%s8 + $0x30] sm:$0xf]
    %v797 = vld [vmem:[%s8 + $0x34] sm:$0xf]
    %v798 = vld [vmem:[%s8 + $0x38] sm:$0xf]
    %v799 = vld [vmem:[%s8 + $0x3c] sm:$0xf]
    %v800 = vld [vmem:[%s9] sm:$0x1]
    %v802 = vperm.slane %v800, 0
    %v820 = vunpack.c.l.b16 %v784
    %v821 = vunpack.c.l.b16 %v785
    %v822 = vunpack.c.l.b16 %v786
    %v823 = vunpack.c.l.b16 %v787
    %v824 = vunpack.c.l.b16 %v788
    %v825 = vunpack.c.l.b16 %v789
    %v826 = vunpack.c.l.b16 %v790
    %v827 = vunpack.c.l.b16 %v791
    %v828 = vunpack.c.l.b16 %v792
    %v829 = vunpack.c.l.b16 %v793
    %v830 = vunpack.c.l.b16 %v794
    %v831 = vunpack.c.l.b16 %v795
    %v832 = vunpack.c.l.b16 %v796
    %v833 = vunpack.c.l.b16 %v797
    %v834 = vunpack.c.l.b16 %v798
    %v835 = vunpack.c.l.b16 %v799
    %v836 = vpack.c.b16 %v821, %v820
    %v837 = vpack.c.b16 %v823, %v822
    %v838 = vpack.c.b16 %v825, %v824
    %v839 = vpack.c.b16 %v827, %v826
    %v840 = vpack.c.b16 %v829, %v828
    %v841 = vpack.c.b16 %v831, %v830
    %v842 = vpack.c.b16 %v833, %v832
    %v843 = vpack.c.b16 %v835, %v834
    %852 = vmatpush.bf16.msra.mxu0 %v843
    %853 = vmatpush.bf16.msra.mxu0 %v842
    %854 = vmatpush.bf16.msra.mxu0 %v841
    %855 = vmatpush.bf16.msra.mxu0 %v840
    %856 = vmatpush.bf16.msra.mxu0 %v839
    %857 = vmatpush.bf16.msra.mxu0 %v838
    %858 = vmatpush.bf16.msra.mxu0 %v837
    %859 = vmatpush.bf16.msra.mxu0 %v836
    %860 = vmatmul.bf16.gmra.mxu0 %v783
    %v861 = vpop.f32.mrf.mxu0
    %v862 = vadd.f32 %v802, %v861
    %v863 = vpop.f32.mrf.mxu0
    %v864 = vadd.f32 %v802, %v863
    %865 = vdwg.mxu0
    %v866 = vmax.f32 %v862, 0.0
    %v867 = vmax.f32 %v864, 0.0
    %v868 = vpack.c.bf16 %v867, %v866
    %s869 = scalar_lea.vmem %s3, 16
    %v870 = vld [vmem:[%s869] sm:$0xf]
    %v871 = vld [vmem:[%s869 + $0x4] sm:$0xf]
    %v872 = vld [vmem:[%s869 + $0x8] sm:$0xf]
    %v873 = vld [vmem:[%s869 + $0xc] sm:$0xf]
    %v878 = vunpack.c.l.b16 %v870
    %v879 = vunpack.c.l.b16 %v871
    %v880 = vunpack.c.l.b16 %v872
    %v881 = vunpack.c.l.b16 %v873
    %v882 = vpack.c.b16 %v879, %v878
    %v883 = vpack.c.b16 %v881, %v880
    %v887 = vsel %vm120, %v868, 0
    %889 = vmatpush.bf16.msra.mxu0 0
    %890 = vmatpush.bf16.msra.mxu0 0
    %891 = vmatpush.bf16.msra.mxu0 0
    %892 = vmatpush.bf16.msra.mxu0 0
    %893 = vmatpush.bf16.msra.mxu0 0
    %894 = vmatpush.bf16.msra.mxu0 0
    %895 = vmatpush.bf16.msra.mxu0 %v883
    %896 = vmatpush.bf16.msra.mxu0 %v882
    %897 = vmatmul.bf16.gmra.mxu0 %v887
    %v898 = vpop.f32.mrf.mxu0
    %v899 = vadd.f32 0.0, %v898
    %v900 = vpop.f32.mrf.mxu0
    %v901 = vadd.f32 0.0, %v900
    %902 = vdwg.mxu0
    %904 = vrot.lane.b32.xlu0 %v899, 96
    %v905 = vpop.permute.xlu0 %904
    %v906 = vsel %vm141, %v899, 0
    %v908 = vsel %vm141, %v905, 0
    %910 = vmatpush.xpose.msra.mxu0 0.0
    %911 = vmatpush.xpose.msra.mxu0 0.0
    %912 = vmatpush.xpose.msra.mxu0 0.0
    %913 = vmatpush.xpose.msra.mxu0 0.0
    %914 = vmatpush.xpose.msra.mxu0 0.0
    %915 = vmatpush.xpose.msra.mxu0 0.0
    %916 = vmatpush.xpose.msra.mxu0 0.0
    %917 = vmatpush.xpose.msra.mxu0 0.0
    %918 = vmatpush.xpose.msra.mxu0 0.0
    %919 = vmatpush.xpose.msra.mxu0 0.0
    %920 = vmatpush.xpose.msra.mxu0 0.0
    %921 = vmatpush.xpose.msra.mxu0 0.0
    %922 = vmatpush.xpose.msra.mxu0 0.0
    %923 = vmatpush.xpose.msra.mxu0 0.0
    %924 = vmatpush.xpose.msra.mxu0 0.0
    %925 = vmatpush.xpose.msra.mxu0 %v908
    %926 = vmatmul.f32.gmra.mxu0 %v906
    %v927 = vpop.f32.mrf.mxu0
    %v928 = vadd.f32 0.0, %v927
    %929 = vdwg.mxu0
    %931 = vrot.lane.b32.xlu0 %v901, 96
    %v932 = vpop.permute.xlu0 %931
    %v933 = vsel %vm141, %v901, 0
    %v935 = vsel %vm141, %v932, 0
    %937 = vmatpush.xpose.msra.mxu0 0.0
    %938 = vmatpush.xpose.msra.mxu0 0.0
    %939 = vmatpush.xpose.msra.mxu0 0.0
    %940 = vmatpush.xpose.msra.mxu0 0.0
    %941 = vmatpush.xpose.msra.mxu0 0.0
    %942 = vmatpush.xpose.msra.mxu0 0.0
    %943 = vmatpush.xpose.msra.mxu0 0.0
    %944 = vmatpush.xpose.msra.mxu0 0.0
    %945 = vmatpush.xpose.msra.mxu0 0.0
    %946 = vmatpush.xpose.msra.mxu0 0.0
    %947 = vmatpush.xpose.msra.mxu0 0.0
    %948 = vmatpush.xpose.msra.mxu0 0.0
    %949 = vmatpush.xpose.msra.mxu0 0.0
    %950 = vmatpush.xpose.msra.mxu0 0.0
    %951 = vmatpush.xpose.msra.mxu0 0.0
    %952 = vmatpush.xpose.msra.mxu0 %v935
    %953 = vmatmul.f32.gmra.mxu0 %v933
    %v954 = vpop.f32.mrf.mxu0
    %v955 = vadd.f32 0.0, %v954
    %956 = vdwg.mxu0
    %v957 = vmul.f32 %v928, 0.17677669
    %v958 = vmul.f32 %v955, 0.17677669
    %v959 = vadd.f32 %v957, %v102
    %v960 = vadd.f32 %v958, %v102
    %v961 = vsel %vm141, %v959, -inf
    %962 = vmax.xlane.f32.xlu0 %v961
    %v963 = vpop.xlane.xlu0 %962
    %v964 = vsel %vm141, %v960, -inf
    %965 = vmax.xlane.f32.xlu0 %v964
    %v966 = vpop.xlane.xlu0 %965
    %v967 = vsub.f32 %v959, %v963
    %v968 = vsub.f32 %v960, %v966
    %v969 = vmul.f32 %v967, 1.442695
    %v970 = vpow.pop %v969
    %v971 = vmul.f32 %v968, 1.442695
    %v972 = vpow.pop %v971
    %v973 = vsel %vm141, %v970, 0.0
    %974 = vadd.xlane.f32.xlu0 %v973
    %v975 = vpop.xlane.xlu0 %974
    %v976 = vsel %vm141, %v972, 0.0
    %977 = vadd.xlane.f32.xlu0 %v976
    %v978 = vpop.xlane.xlu0 %977
    %v979 = vrcp.pop %v975
    %v980 = vrcp.pop %v978
    %v981 = vmul.f32 %v970, %v979
    %v982 = vmul.f32 %v972, %v980
    %983 = vrot.lane.b32.xlu0 %v899, 64
    %v984 = vpop.permute.xlu0 %983
    %v987 = vsel %vm141, %v981, 0
    %989 = vmatpush.msra.mxu0 0.0
    %990 = vmatpush.msra.mxu0 0.0
    %991 = vmatpush.msra.mxu0 0.0
    %992 = vmatpush.msra.mxu0 0.0
    %993 = vmatpush.msra.mxu0 0.0
    %994 = vmatpush.msra.mxu0 0.0
    %995 = vmatpush.msra.mxu0 0.0
    %996 = vmatpush.msra.mxu0 0.0
    %997 = vmatpush.msra.mxu0 0.0
    %998 = vmatpush.msra.mxu0 0.0
    %999 = vmatpush.msra.mxu0 0.0
    %1000 = vmatpush.msra.mxu0 0.0
    %1001 = vmatpush.msra.mxu0 0.0
    %1002 = vmatpush.msra.mxu0 0.0
    %1003 = vmatpush.msra.mxu0 0.0
    %1004 = vmatpush.msra.mxu0 %v984
    %1005 = vmatmul.f32.gmra.mxu0 %v987
    %v1006 = vpop.f32.mrf.mxu0
    %v1007 = vadd.f32 0.0, %v1006
    %1008 = vdwg.mxu0
    %1009 = vrot.lane.b32.xlu0 %v901, 64
    %v1010 = vpop.permute.xlu0 %1009
    %v1013 = vsel %vm141, %v982, 0
    %1015 = vmatpush.msra.mxu0 0.0
    %1016 = vmatpush.msra.mxu0 0.0
    %1017 = vmatpush.msra.mxu0 0.0
    %1018 = vmatpush.msra.mxu0 0.0
    %1019 = vmatpush.msra.mxu0 0.0
    %1020 = vmatpush.msra.mxu0 0.0
    %1021 = vmatpush.msra.mxu0 0.0
    %1022 = vmatpush.msra.mxu0 0.0
    %1023 = vmatpush.msra.mxu0 0.0
    %1024 = vmatpush.msra.mxu0 0.0
    %1025 = vmatpush.msra.mxu0 0.0
    %1026 = vmatpush.msra.mxu0 0.0
    %1027 = vmatpush.msra.mxu0 0.0
    %1028 = vmatpush.msra.mxu0 0.0
    %1029 = vmatpush.msra.mxu0 0.0
    %1030 = vmatpush.msra.mxu0 %v1010
    %1031 = vmatmul.f32.gmra.mxu0 %v1013
    %v1032 = vpop.f32.mrf.mxu0
    %v1033 = vadd.f32 0.0, %v1032
    %1034 = vdwg.mxu0
    %1035 = vrot.lane.b32.xlu0 %v899, 120
    %v1036 = vpop.permute.xlu0 %1035
    %1037 = vrot.lane.b32.xlu0 %v899, 88
    %v1038 = vpop.permute.xlu0 %1037
    %v1039 = vsel %vm141, %v1036, 0
    %v1041 = vsel %vm141, %v1038, 0
    %1043 = vmatpush.xpose.msra.mxu0 0.0
    %1044 = vmatpush.xpose.msra.mxu0 0.0
    %1045 = vmatpush.xpose.msra.mxu0 0.0
    %1046 = vmatpush.xpose.msra.mxu0 0.0
    %1047 = vmatpush.xpose.msra.mxu0 0.0
    %1048 = vmatpush.xpose.msra.mxu0 0.0
    %1049 = vmatpush.xpose.msra.mxu0 0.0
    %1050 = vmatpush.xpose.msra.mxu0 0.0
    %1051 = vmatpush.xpose.msra.mxu0 0.0
    %1052 = vmatpush.xpose.msra.mxu0 0.0
    %1053 = vmatpush.xpose.msra.mxu0 0.0
    %1054 = vmatpush.xpose.msra.mxu0 0.0
    %1055 = vmatpush.xpose.msra.mxu0 0.0
    %1056 = vmatpush.xpose.msra.mxu0 0.0
    %1057 = vmatpush.xpose.msra.mxu0 0.0
    %1058 = vmatpush.xpose.msra.mxu0 %v1041
    %1059 = vmatmul.f32.gmra.mxu0 %v1039
    %v1060 = vpop.f32.mrf.mxu0
    %v1061 = vadd.f32 0.0, %v1060
    %1062 = vdwg.mxu0
    %1063 = vrot.lane.b32.xlu0 %v901, 120
    %v1064 = vpop.permute.xlu0 %1063
    %1065 = vrot.lane.b32.xlu0 %v901, 88
    %v1066 = vpop.permute.xlu0 %1065
    %v1067 = vsel %vm141, %v1064, 0
    %v1069 = vsel %vm141, %v1066, 0
    %1071 = vmatpush.xpose.msra.mxu0 0.0
    %1072 = vmatpush.xpose.msra.mxu0 0.0
    %1073 = vmatpush.xpose.msra.mxu0 0.0
    %1074 = vmatpush.xpose.msra.mxu0 0.0
    %1075 = vmatpush.xpose.msra.mxu0 0.0
    %1076 = vmatpush.xpose.msra.mxu0 0.0
    %1077 = vmatpush.xpose.msra.mxu0 0.0
    %1078 = vmatpush.xpose.msra.mxu0 0.0
    %1079 = vmatpush.xpose.msra.mxu0 0.0
    %1080 = vmatpush.xpose.msra.mxu0 0.0
    %1081 = vmatpush.xpose.msra.mxu0 0.0
    %1082 = vmatpush.xpose.msra.mxu0 0.0
    %1083 = vmatpush.xpose.msra.mxu0 0.0
    %1084 = vmatpush.xpose.msra.mxu0 0.0
    %1085 = vmatpush.xpose.msra.mxu0 0.0
    %1086 = vmatpush.xpose.msra.mxu0 %v1069
    %1087 = vmatmul.f32.gmra.mxu0 %v1067
    %v1088 = vpop.f32.mrf.mxu0
    %v1089 = vadd.f32 0.0, %v1088
    %1090 = vdwg.mxu0
    %v1091 = vmul.f32 %v1061, 0.17677669
    %v1092 = vmul.f32 %v1089, 0.17677669
    %v1093 = vadd.f32 %v1091, %v102
    %v1094 = vadd.f32 %v1092, %v102
    %v1095 = vsel %vm141, %v1093, -inf
    %1096 = vmax.xlane.f32.xlu0 %v1095
    %v1097 = vpop.xlane.xlu0 %1096
    %v1098 = vsel %vm141, %v1094, -inf
    %1099 = vmax.xlane.f32.xlu0 %v1098
    %v1100 = vpop.xlane.xlu0 %1099
    %v1101 = vsub.f32 %v1093, %v1097
    %v1102 = vsub.f32 %v1094, %v1100
    %v1103 = vmul.f32 %v1101, 1.442695
    %v1104 = vpow.pop %v1103
    %v1105 = vmul.f32 %v1102, 1.442695
    %v1106 = vpow.pop %v1105
    %v1107 = vsel %vm141, %v1104, 0.0
    %1108 = vadd.xlane.f32.xlu0 %v1107
    %v1109 = vpop.xlane.xlu0 %1108
    %v1110 = vsel %vm141, %v1106, 0.0
    %1111 = vadd.xlane.f32.xlu0 %v1110
    %v1112 = vpop.xlane.xlu0 %1111
    %v1113 = vrcp.pop %v1109
    %v1114 = vrcp.pop %v1112
    %v1115 = vmul.f32 %v1104, %v1113
    %v1116 = vmul.f32 %v1106, %v1114
    %1117 = vrot.lane.b32.xlu0 %v899, 56
    %v1118 = vpop.permute.xlu0 %1117
    %v1121 = vsel %vm141, %v1115, 0
    %1123 = vmatpush.msra.mxu0 0.0
    %1124 = vmatpush.msra.mxu0 0.0
    %1125 = vmatpush.msra.mxu0 0.0
    %1126 = vmatpush.msra.mxu0 0.0
    %1127 = vmatpush.msra.mxu0 0.0
    %1128 = vmatpush.msra.mxu0 0.0
    %1129 = vmatpush.msra.mxu0 0.0
    %1130 = vmatpush.msra.mxu0 0.0
    %1131 = vmatpush.msra.mxu0 0.0
    %1132 = vmatpush.msra.mxu0 0.0
    %1133 = vmatpush.msra.mxu0 0.0
    %1134 = vmatpush.msra.mxu0 0.0
    %1135 = vmatpush.msra.mxu0 0.0
    %1136 = vmatpush.msra.mxu0 0.0
    %1137 = vmatpush.msra.mxu0 0.0
    %1138 = vmatpush.msra.mxu0 %v1118
    %1139 = vmatmul.f32.gmra.mxu0 %v1121
    %v1140 = vpop.f32.mrf.mxu0
    %v1141 = vadd.f32 0.0, %v1140
    %1142 = vdwg.mxu0
    %1143 = vrot.lane.b32.xlu0 %v901, 56
    %v1144 = vpop.permute.xlu0 %1143
    %v1147 = vsel %vm141, %v1116, 0
    %1149 = vmatpush.msra.mxu0 0.0
    %1150 = vmatpush.msra.mxu0 0.0
    %1151 = vmatpush.msra.mxu0 0.0
    %1152 = vmatpush.msra.mxu0 0.0
    %1153 = vmatpush.msra.mxu0 0.0
    %1154 = vmatpush.msra.mxu0 0.0
    %1155 = vmatpush.msra.mxu0 0.0
    %1156 = vmatpush.msra.mxu0 0.0
    %1157 = vmatpush.msra.mxu0 0.0
    %1158 = vmatpush.msra.mxu0 0.0
    %1159 = vmatpush.msra.mxu0 0.0
    %1160 = vmatpush.msra.mxu0 0.0
    %1161 = vmatpush.msra.mxu0 0.0
    %1162 = vmatpush.msra.mxu0 0.0
    %1163 = vmatpush.msra.mxu0 0.0
    %1164 = vmatpush.msra.mxu0 %v1144
    %1165 = vmatmul.f32.gmra.mxu0 %v1147
    %v1166 = vpop.f32.mrf.mxu0
    %v1167 = vadd.f32 0.0, %v1166
    %1168 = vdwg.mxu0
    %1169 = vrot.lane.b32.xlu0 %v899, 112
    %v1170 = vpop.permute.xlu0 %1169
    %1171 = vrot.lane.b32.xlu0 %v899, 80
    %v1172 = vpop.permute.xlu0 %1171
    %v1173 = vsel %vm141, %v1170, 0
    %v1175 = vsel %vm141, %v1172, 0
    %1177 = vmatpush.xpose.msra.mxu0 0.0
    %1178 = vmatpush.xpose.msra.mxu0 0.0
    %1179 = vmatpush.xpose.msra.mxu0 0.0
    %1180 = vmatpush.xpose.msra.mxu0 0.0
    %1181 = vmatpush.xpose.msra.mxu0 0.0
    %1182 = vmatpush.xpose.msra.mxu0 0.0
    %1183 = vmatpush.xpose.msra.mxu0 0.0
    %1184 = vmatpush.xpose.msra.mxu0 0.0
    %1185 = vmatpush.xpose.msra.mxu0 0.0
    %1186 = vmatpush.xpose.msra.mxu0 0.0
    %1187 = vmatpush.xpose.msra.mxu0 0.0
    %1188 = vmatpush.xpose.msra.mxu0 0.0
    %1189 = vmatpush.xpose.msra.mxu0 0.0
    %1190 = vmatpush.xpose.msra.mxu0 0.0
    %1191 = vmatpush.xpose.msra.mxu0 0.0
    %1192 = vmatpush.xpose.msra.mxu0 %v1175
    %1193 = vmatmul.f32.gmra.mxu0 %v1173
    %v1194 = vpop.f32.mrf.mxu0
    %v1195 = vadd.f32 0.0, %v1194
    %1196 = vdwg.mxu0
    %1197 = vrot.lane.b32.xlu0 %v901, 112
    %v1198 = vpop.permute.xlu0 %1197
    %1199 = vrot.lane.b32.xlu0 %v901, 80
    %v1200 = vpop.permute.xlu0 %1199
    %v1201 = vsel %vm141, %v1198, 0
    %v1203 = vsel %vm141, %v1200, 0
    %1205 = vmatpush.xpose.msra.mxu0 0.0
    %1206 = vmatpush.xpose.msra.mxu0 0.0
    %1207 = vmatpush.xpose.msra.mxu0 0.0
    %1208 = vmatpush.xpose.msra.mxu0 0.0
    %1209 = vmatpush.xpose.msra.mxu0 0.0
    %1210 = vmatpush.xpose.msra.mxu0 0.0
    %1211 = vmatpush.xpose.msra.mxu0 0.0
    %1212 = vmatpush.xpose.msra.mxu0 0.0
    %1213 = vmatpush.xpose.msra.mxu0 0.0
    %1214 = vmatpush.xpose.msra.mxu0 0.0
    %1215 = vmatpush.xpose.msra.mxu0 0.0
    %1216 = vmatpush.xpose.msra.mxu0 0.0
    %1217 = vmatpush.xpose.msra.mxu0 0.0
    %1218 = vmatpush.xpose.msra.mxu0 0.0
    %1219 = vmatpush.xpose.msra.mxu0 0.0
    %1220 = vmatpush.xpose.msra.mxu0 %v1203
    %1221 = vmatmul.f32.gmra.mxu0 %v1201
    %v1222 = vpop.f32.mrf.mxu0
    %v1223 = vadd.f32 0.0, %v1222
    %1224 = vdwg.mxu0
    %v1225 = vmul.f32 %v1195, 0.17677669
    %v1226 = vmul.f32 %v1223, 0.17677669
    %v1227 = vadd.f32 %v1225, %v102
    %v1228 = vadd.f32 %v1226, %v102
    %v1229 = vsel %vm141, %v1227, -inf
    %1230 = vmax.xlane.f32.xlu0 %v1229
    %v1231 = vpop.xlane.xlu0 %1230
    %v1232 = vsel %vm141, %v1228, -inf
    %1233 = vmax.xlane.f32.xlu0 %v1232
    %v1234 = vpop.xlane.xlu0 %1233
    %v1235 = vsub.f32 %v1227, %v1231
    %v1236 = vsub.f32 %v1228, %v1234
    %v1237 = vmul.f32 %v1235, 1.442695
    %v1238 = vpow.pop %v1237
    %v1239 = vmul.f32 %v1236, 1.442695
    %v1240 = vpow.pop %v1239
    %v1241 = vsel %vm141, %v1238, 0.0
    %1242 = vadd.xlane.f32.xlu0 %v1241
    %v1243 = vpop.xlane.xlu0 %1242
    %v1244 = vsel %vm141, %v1240, 0.0
    %1245 = vadd.xlane.f32.xlu0 %v1244
    %v1246 = vpop.xlane.xlu0 %1245
    %v1247 = vrcp.pop %v1243
    %v1248 = vrcp.pop %v1246
    %v1249 = vmul.f32 %v1238, %v1247
    %v1250 = vmul.f32 %v1240, %v1248
    %1251 = vrot.lane.b32.xlu0 %v899, 48
    %v1252 = vpop.permute.xlu0 %1251
    %v1255 = vsel %vm141, %v1249, 0
    %1257 = vmatpush.msra.mxu0 0.0
    %1258 = vmatpush.msra.mxu0 0.0
    %1259 = vmatpush.msra.mxu0 0.0
    %1260 = vmatpush.msra.mxu0 0.0
    %1261 = vmatpush.msra.mxu0 0.0
    %1262 = vmatpush.msra.mxu0 0.0
    %1263 = vmatpush.msra.mxu0 0.0
    %1264 = vmatpush.msra.mxu0 0.0
    %1265 = vmatpush.msra.mxu0 0.0
    %1266 = vmatpush.msra.mxu0 0.0
    %1267 = vmatpush.msra.mxu0 0.0
    %1268 = vmatpush.msra.mxu0 0.0
    %1269 = vmatpush.msra.mxu0 0.0
    %1270 = vmatpush.msra.mxu0 0.0
    %1271 = vmatpush.msra.mxu0 0.0
    %1272 = vmatpush.msra.mxu0 %v1252
    %1273 = vmatmul.f32.gmra.mxu0 %v1255
    %v1274 = vpop.f32.mrf.mxu0
    %v1275 = vadd.f32 0.0, %v1274
    %1276 = vdwg.mxu0
    %1277 = vrot.lane.b32.xlu0 %v901, 48
    %v1278 = vpop.permute.xlu0 %1277
    %v1281 = vsel %vm141, %v1250, 0
    %1283 = vmatpush.msra.mxu0 0.0
    %1284 = vmatpush.msra.mxu0 0.0
    %1285 = vmatpush.msra.mxu0 0.0
    %1286 = vmatpush.msra.mxu0 0.0
    %1287 = vmatpush.msra.mxu0 0.0
    %1288 = vmatpush.msra.mxu0 0.0
    %1289 = vmatpush.msra.mxu0 0.0
    %1290 = vmatpush.msra.mxu0 0.0
    %1291 = vmatpush.msra.mxu0 0.0
    %1292 = vmatpush.msra.mxu0 0.0
    %1293 = vmatpush.msra.mxu0 0.0
    %1294 = vmatpush.msra.mxu0 0.0
    %1295 = vmatpush.msra.mxu0 0.0
    %1296 = vmatpush.msra.mxu0 0.0
    %1297 = vmatpush.msra.mxu0 0.0
    %1298 = vmatpush.msra.mxu0 %v1278
    %1299 = vmatmul.f32.gmra.mxu0 %v1281
    %v1300 = vpop.f32.mrf.mxu0
    %v1301 = vadd.f32 0.0, %v1300
    %1302 = vdwg.mxu0
    %1303 = vrot.lane.b32.xlu0 %v899, 104
    %v1304 = vpop.permute.xlu0 %1303
    %1305 = vrot.lane.b32.xlu0 %v899, 72
    %v1306 = vpop.permute.xlu0 %1305
    %v1307 = vsel %vm141, %v1304, 0
    %v1309 = vsel %vm141, %v1306, 0
    %1311 = vmatpush.xpose.msra.mxu0 0.0
    %1312 = vmatpush.xpose.msra.mxu0 0.0
    %1313 = vmatpush.xpose.msra.mxu0 0.0
    %1314 = vmatpush.xpose.msra.mxu0 0.0
    %1315 = vmatpush.xpose.msra.mxu0 0.0
    %1316 = vmatpush.xpose.msra.mxu0 0.0
    %1317 = vmatpush.xpose.msra.mxu0 0.0
    %1318 = vmatpush.xpose.msra.mxu0 0.0
    %1319 = vmatpush.xpose.msra.mxu0 0.0
    %1320 = vmatpush.xpose.msra.mxu0 0.0
    %1321 = vmatpush.xpose.msra.mxu0 0.0
    %1322 = vmatpush.xpose.msra.mxu0 0.0
    %1323 = vmatpush.xpose.msra.mxu0 0.0
    %1324 = vmatpush.xpose.msra.mxu0 0.0
    %1325 = vmatpush.xpose.msra.mxu0 0.0
    %1326 = vmatpush.xpose.msra.mxu0 %v1309
    %1327 = vmatmul.f32.gmra.mxu0 %v1307
    %v1328 = vpop.f32.mrf.mxu0
    %v1329 = vadd.f32 0.0, %v1328
    %1330 = vdwg.mxu0
    %1331 = vrot.lane.b32.xlu0 %v901, 104
    %v1332 = vpop.permute.xlu0 %1331
    %1333 = vrot.lane.b32.xlu0 %v901, 72
    %v1334 = vpop.permute.xlu0 %1333
    %v1335 = vsel %vm141, %v1332, 0
    %v1337 = vsel %vm141, %v1334, 0
    %1339 = vmatpush.xpose.msra.mxu0 0.0
    %1340 = vmatpush.xpose.msra.mxu0 0.0
    %1341 = vmatpush.xpose.msra.mxu0 0.0
    %1342 = vmatpush.xpose.msra.mxu0 0.0
    %1343 = vmatpush.xpose.msra.mxu0 0.0
    %1344 = vmatpush.xpose.msra.mxu0 0.0
    %1345 = vmatpush.xpose.msra.mxu0 0.0
    %1346 = vmatpush.xpose.msra.mxu0 0.0
    %1347 = vmatpush.xpose.msra.mxu0 0.0
    %1348 = vmatpush.xpose.msra.mxu0 0.0
    %1349 = vmatpush.xpose.msra.mxu0 0.0
    %1350 = vmatpush.xpose.msra.mxu0 0.0
    %1351 = vmatpush.xpose.msra.mxu0 0.0
    %1352 = vmatpush.xpose.msra.mxu0 0.0
    %1353 = vmatpush.xpose.msra.mxu0 0.0
    %1354 = vmatpush.xpose.msra.mxu0 %v1337
    %1355 = vmatmul.f32.gmra.mxu0 %v1335
    %v1356 = vpop.f32.mrf.mxu0
    %v1357 = vadd.f32 0.0, %v1356
    %1358 = vdwg.mxu0
    %v1359 = vmul.f32 %v1329, 0.17677669
    %v1360 = vmul.f32 %v1357, 0.17677669
    %v1361 = vadd.f32 %v1359, %v102
    %v1362 = vadd.f32 %v1360, %v102
    %v1363 = vsel %vm141, %v1361, -inf
    %1364 = vmax.xlane.f32.xlu0 %v1363
    %v1365 = vpop.xlane.xlu0 %1364
    %v1366 = vsel %vm141, %v1362, -inf
    %1367 = vmax.xlane.f32.xlu0 %v1366
    %v1368 = vpop.xlane.xlu0 %1367
    %v1369 = vsub.f32 %v1361, %v1365
    %v1370 = vsub.f32 %v1362, %v1368
    %v1371 = vmul.f32 %v1369, 1.442695
    %v1372 = vpow.pop %v1371
    %v1373 = vmul.f32 %v1370, 1.442695
    %v1374 = vpow.pop %v1373
    %v1375 = vsel %vm141, %v1372, 0.0
    %1376 = vadd.xlane.f32.xlu0 %v1375
    %v1377 = vpop.xlane.xlu0 %1376
    %v1378 = vsel %vm141, %v1374, 0.0
    %1379 = vadd.xlane.f32.xlu0 %v1378
    %v1380 = vpop.xlane.xlu0 %1379
    %v1381 = vrcp.pop %v1377
    %v1382 = vrcp.pop %v1380
    %v1383 = vmul.f32 %v1372, %v1381
    %v1384 = vmul.f32 %v1374, %v1382
    %1385 = vrot.lane.b32.xlu0 %v899, 40
    %v1386 = vpop.permute.xlu0 %1385
    %v1389 = vsel %vm141, %v1383, 0
    %1391 = vmatpush.msra.mxu0 0.0
    %1392 = vmatpush.msra.mxu0 0.0
    %1393 = vmatpush.msra.mxu0 0.0
    %1394 = vmatpush.msra.mxu0 0.0
    %1395 = vmatpush.msra.mxu0 0.0
    %1396 = vmatpush.msra.mxu0 0.0
    %1397 = vmatpush.msra.mxu0 0.0
    %1398 = vmatpush.msra.mxu0 0.0
    %1399 = vmatpush.msra.mxu0 0.0
    %1400 = vmatpush.msra.mxu0 0.0
    %1401 = vmatpush.msra.mxu0 0.0
    %1402 = vmatpush.msra.mxu0 0.0
    %1403 = vmatpush.msra.mxu0 0.0
    %1404 = vmatpush.msra.mxu0 0.0
    %1405 = vmatpush.msra.mxu0 0.0
    %1406 = vmatpush.msra.mxu0 %v1386
    %1407 = vmatmul.f32.gmra.mxu0 %v1389
    %v1408 = vpop.f32.mrf.mxu0
    %v1409 = vadd.f32 0.0, %v1408
    %1410 = vdwg.mxu0
    %1411 = vrot.lane.b32.xlu0 %v901, 40
    %v1412 = vpop.permute.xlu0 %1411
    %v1415 = vsel %vm141, %v1384, 0
    %1417 = vmatpush.msra.mxu0 0.0
    %1418 = vmatpush.msra.mxu0 0.0
    %1419 = vmatpush.msra.mxu0 0.0
    %1420 = vmatpush.msra.mxu0 0.0
    %1421 = vmatpush.msra.mxu0 0.0
    %1422 = vmatpush.msra.mxu0 0.0
    %1423 = vmatpush.msra.mxu0 0.0
    %1424 = vmatpush.msra.mxu0 0.0
    %1425 = vmatpush.msra.mxu0 0.0
    %1426 = vmatpush.msra.mxu0 0.0
    %1427 = vmatpush.msra.mxu0 0.0
    %1428 = vmatpush.msra.mxu0 0.0
    %1429 = vmatpush.msra.mxu0 0.0
    %1430 = vmatpush.msra.mxu0 0.0
    %1431 = vmatpush.msra.mxu0 0.0
    %1432 = vmatpush.msra.mxu0 %v1412
    %1433 = vmatmul.f32.gmra.mxu0 %v1415
    %v1434 = vpop.f32.mrf.mxu0
    %v1435 = vadd.f32 0.0, %v1434
    %1436 = vdwg.mxu0
    %1439 = vrot.lane.b32.xlu0 %v1141, 8
    %v1440 = vpop.permute.xlu0 %1439
    %1441 = vrot.lane.b32.xlu0 %v1167, 8
    %v1442 = vpop.permute.xlu0 %1441
    %1447 = vrot.lane.b32.xlu0 %v1275, 16
    %v1448 = vpop.permute.xlu0 %1447
    %1449 = vrot.lane.b32.xlu0 %v1301, 16
    %v1450 = vpop.permute.xlu0 %1449
    %1455 = vrot.lane.b32.xlu0 %v1409, 24
    %v1456 = vpop.permute.xlu0 %1455
    %1457 = vrot.lane.b32.xlu0 %v1435, 24
    %v1458 = vpop.permute.xlu0 %1457
    %v1461 = vsel %vm141, %v1007, %v1440
    %v1462 = vsel %vm141, %v1033, %v1442
    %v1463 = vsel %vm699, %v1461, %v1448
    %v1464 = vsel %vm699, %v1462, %v1450
    %v1465 = vsel %vm702, %v1463, %v1456
    %v1466 = vsel %vm702, %v1464, %v1458
    %v1467 = vpack.c.bf16 %v1466, %v1465
    %s1468 = scalar_lea.vmem %s4, 16
    %v1469 = vld [vmem:[%s1468] sm:$0xf]
    %v1470 = vld [vmem:[%s1468 + $0x4] sm:$0xf]
    %v1471 = vld [vmem:[%s1468 + $0x8] sm:$0xf]
    %v1472 = vld [vmem:[%s1468 + $0xc] sm:$0xf]
    %s1473 = scalar_lea.vmem %s5, 1
    %v1474 = vld [vmem:[%s1473] sm:$0x1]
    %v1476 = vperm.slane %v1474, 0
    %v1482 = vunpack.c.l.b16 %v1469
    %v1483 = vunpack.c.l.b16 %v1470
    %v1484 = vunpack.c.l.b16 %v1471
    %v1485 = vunpack.c.l.b16 %v1472
    %v1486 = vpack.c.b16 %v1483, %v1482
    %v1487 = vpack.c.b16 %v1485, %v1484
    %v1491 = vsel %vm120, %v1467, 0
    %1493 = vmatpush.bf16.msra.mxu0 0
    %1494 = vmatpush.bf16.msra.mxu0 0
    %1495 = vmatpush.bf16.msra.mxu0 0
    %1496 = vmatpush.bf16.msra.mxu0 0
    %1497 = vmatpush.bf16.msra.mxu0 0
    %1498 = vmatpush.bf16.msra.mxu0 0
    %1499 = vmatpush.bf16.msra.mxu0 %v1487
    %1500 = vmatpush.bf16.msra.mxu0 %v1486
    %1501 = vmatmul.bf16.gmra.mxu0 %v1491
    %v1502 = vpop.f32.mrf.mxu0
    %v1503 = vadd.f32 %v1476, %v1502
    %v1504 = vpop.f32.mrf.mxu0
    %v1505 = vadd.f32 %v1476, %v1504
    %1506 = vdwg.mxu0
    %v1507 = vpack.c.bf16 %v1505, %v1503
    %s1508 = scalar_lea.vmem %s6, 16
    %v1509 = vld [vmem:[%s1508] sm:$0xf]
    %v1510 = vld [vmem:[%s1508 + $0x4] sm:$0xf]
    %v1511 = vld [vmem:[%s1508 + $0x8] sm:$0xf]
    %v1512 = vld [vmem:[%s1508 + $0xc] sm:$0xf]
    %s1513 = scalar_lea.vmem %s7, 1
    %v1514 = vld [vmem:[%s1513] sm:$0x1]
    %v1516 = vperm.slane %v1514, 0
    %v1522 = vunpack.c.l.b16 %v1509
    %v1523 = vunpack.c.l.b16 %v1510
    %v1524 = vunpack.c.l.b16 %v1511
    %v1525 = vunpack.c.l.b16 %v1512
    %v1526 = vpack.c.b16 %v1523, %v1522
    %v1527 = vpack.c.b16 %v1525, %v1524
    %v1531 = vsel %vm120, %v1507, 0
    %1533 = vmatpush.bf16.msra.mxu0 0
    %1534 = vmatpush.bf16.msra.mxu0 0
    %1535 = vmatpush.bf16.msra.mxu0 0
    %1536 = vmatpush.bf16.msra.mxu0 0
    %1537 = vmatpush.bf16.msra.mxu0 0
    %1538 = vmatpush.bf16.msra.mxu0 0
    %1539 = vmatpush.bf16.msra.mxu0 %v1527
    %1540 = vmatpush.bf16.msra.mxu0 %v1526
    %1541 = vmatmul.bf16.gmra.mxu0 %v1531
    %v1542 = vpop.f32.mrf.mxu0
    %v1543 = vadd.f32 %v1516, %v1542
    %v1544 = vpop.f32.mrf.mxu0
    %v1545 = vadd.f32 %v1516, %v1544
    %1546 = vdwg.mxu0
    %v1547 = vmax.f32 %v1543, 0.0
    %v1548 = vmax.f32 %v1545, 0.0
    %v1549 = vpack.c.bf16 %v1548, %v1547
    %s1550 = scalar_lea.vmem %s8, 64
    %v1551 = vld [vmem:[%s1550] sm:$0xf]
    %v1552 = vld [vmem:[%s1550 + $0x4] sm:$0xf]
    %v1553 = vld [vmem:[%s1550 + $0x8] sm:$0xf]
    %v1554 = vld [vmem:[%s1550 + $0xc] sm:$0xf]
    %v1555 = vld [vmem:[%s1550 + $0x10] sm:$0xf]
    %v1556 = vld [vmem:[%s1550 + $0x14] sm:$0xf]
    %v1557 = vld [vmem:[%s1550 + $0x18] sm:$0xf]
    %v1558 = vld [vmem:[%s1550 + $0x1c] sm:$0xf]
    %v1559 = vld [vmem:[%s1550 + $0x20] sm:$0xf]
    %v1560 = vld [vmem:[%s1550 + $0x24] sm:$0xf]
    %v1561 = vld [vmem:[%s1550 + $0x28] sm:$0xf]
    %v1562 = vld [vmem:[%s1550 + $0x2c] sm:$0xf]
    %v1563 = vld [vmem:[%s1550 + $0x30] sm:$0xf]
    %v1564 = vld [vmem:[%s1550 + $0x34] sm:$0xf]
    %v1565 = vld [vmem:[%s1550 + $0x38] sm:$0xf]
    %v1566 = vld [vmem:[%s1550 + $0x3c] sm:$0xf]
    %s1567 = scalar_lea.vmem %s9, 1
    %v1568 = vld [vmem:[%s1567] sm:$0x1]
    %v1570 = vperm.slane %v1568, 0
    %v1588 = vunpack.c.l.b16 %v1551
    %v1589 = vunpack.c.l.b16 %v1552
    %v1590 = vunpack.c.l.b16 %v1553
    %v1591 = vunpack.c.l.b16 %v1554
    %v1592 = vunpack.c.l.b16 %v1555
    %v1593 = vunpack.c.l.b16 %v1556
    %v1594 = vunpack.c.l.b16 %v1557
    %v1595 = vunpack.c.l.b16 %v1558
    %v1596 = vunpack.c.l.b16 %v1559
    %v1597 = vunpack.c.l.b16 %v1560
    %v1598 = vunpack.c.l.b16 %v1561
    %v1599 = vunpack.c.l.b16 %v1562
    %v1600 = vunpack.c.l.b16 %v1563
    %v1601 = vunpack.c.l.b16 %v1564
    %v1602 = vunpack.c.l.b16 %v1565
    %v1603 = vunpack.c.l.b16 %v1566
    %v1604 = vpack.c.b16 %v1589, %v1588
    %v1605 = vpack.c.b16 %v1591, %v1590
    %v1606 = vpack.c.b16 %v1593, %v1592
    %v1607 = vpack.c.b16 %v1595, %v1594
    %v1608 = vpack.c.b16 %v1597, %v1596
    %v1609 = vpack.c.b16 %v1599, %v1598
    %v1610 = vpack.c.b16 %v1601, %v1600
    %v1611 = vpack.c.b16 %v1603, %v1602
    %1620 = vmatpush.bf16.msra.mxu0 %v1611
    %1621 = vmatpush.bf16.msra.mxu0 %v1610
    %1622 = vmatpush.bf16.msra.mxu0 %v1609
    %1623 = vmatpush.bf16.msra.mxu0 %v1608
    %1624 = vmatpush.bf16.msra.mxu0 %v1607
    %1625 = vmatpush.bf16.msra.mxu0 %v1606
    %1626 = vmatpush.bf16.msra.mxu0 %v1605
    %1627 = vmatpush.bf16.msra.mxu0 %v1604
    %1628 = vmatmul.bf16.gmra.mxu0 %v1549
    %v1629 = vpop.f32.mrf.mxu0
    %v1630 = vadd.f32 %v1570, %v1629
    %v1631 = vpop.f32.mrf.mxu0
    %v1632 = vadd.f32 %v1570, %v1631
    %1633 = vdwg.mxu0
    %v1634 = vmax.f32 %v1630, 0.0
    %v1635 = vmax.f32 %v1632, 0.0
    %v1636 = vpack.c.bf16 %v1635, %v1634
    %v1637 = vld [vmem:[%s10] sm:$0xf]
    %v1638 = vld [vmem:[%s10 + $0x4] sm:$0xf]
    %v1639 = vld [vmem:[%s10 + $0x8] sm:$0xf]
    %v1640 = vld [vmem:[%s10 + $0xc] sm:$0xf]
    %v1641 = vld [vmem:[%s11] sm:$0x1]
    %v1643 = vperm.slane %v1641, 0
    %v1649 = vunpack.c.l.b16 %v1637
    %v1650 = vunpack.c.l.b16 %v1638
    %v1651 = vunpack.c.l.b16 %v1639
    %v1652 = vunpack.c.l.b16 %v1640
    %v1653 = vpack.c.b16 %v1650, %v1649
    %v1654 = vpack.c.b16 %v1652, %v1651
    %v1658 = vsel %vm120, %v1636, 0
    %1660 = vmatpush.bf16.msra.mxu0 0
    %1661 = vmatpush.bf16.msra.mxu0 0
    %1662 = vmatpush.bf16.msra.mxu0 0
    %1663 = vmatpush.bf16.msra.mxu0 0
    %1664 = vmatpush.bf16.msra.mxu0 0
    %1665 = vmatpush.bf16.msra.mxu0 0
    %1666 = vmatpush.bf16.msra.mxu0 %v1654
    %1667 = vmatpush.bf16.msra.mxu0 %v1653
    %1668 = vmatmul.bf16.gmra.mxu0 %v1658
    %v1669 = vpop.f32.mrf.mxu0
    %v1670 = vadd.f32 %v1643, %v1669
    %v1671 = vpop.f32.mrf.mxu0
    %v1672 = vadd.f32 %v1643, %v1671
    %1673 = vdwg.mxu0
    %1674 = vst [vmem:[#allocation2] sm:$0xff] %v1670
    %1675 = vst [vmem:[#allocation2 + $0x8] sm:$0xff] %v1672
    // Predicated region
    $region50: #{tpu_custom_call.1} parent=1 // pred_check
      _
    $region51: #{tpu_custom_call.1} parent=1 // pred_check_branch
      %1677 = sbr.rel (0) target = $region53
    $region52: #{tpu_custom_call.1} parent=1 // pred_region
      %1679 = vsyncadd [#allocation3], 0
      %s1680 = sshll.u32 [#allocation2], 4
      %s1681 = int_to_ptr.vmem [resolvable:$true] %s1680
      %s1682 = sshll.u32 %s12, 4
      %s1683 = int_to_ptr.hbm [resolvable:$true] %s1682
      %1688 = dma.vmem_to_hbm [thread:$0]  %s1681, 256, %s1683, [#allocation3], 128, 128, 8
    $region53: #{tpu_custom_call.1} parent=1 // pred_fallthru
      _
    // Predicated region
    $region54: #{tpu_custom_call.1} parent=1 // pred_check
      _
    $region55: #{tpu_custom_call.1} parent=1 // pred_check_branch
      %1690 = sbr.rel (0) target = $region57
    $region56: #{tpu_custom_call.1} parent=1 // pred_region
      %1692 = dma.done [#allocation3], 256
    $region57: #{tpu_custom_call.1} parent=1 // pred_fallthru
      _
    %1693 = vsyncpa [#allocation3], 1

</llo_original>
